<compile_context>
chip_gen: v5e
topology: v5e:2x2
jax: 0.10.0
libtpu: 0.0.40
codegen_flags: <defaults>
</compile_context>

<pallas_src>
import functools
import numpy as np
import jax
import jax.numpy as jnp
from jax import lax
from jax.experimental import pallas as pl
from jax.experimental.pallas import tpu as pltpu


def _bigru_kernel(len_ref, gif_ref, gib_ref, h0f_ref, h0b_ref,
                  whf_ref, bhf_ref, whb_ref, bhb_ref,
                  outf_ref, outb_ref, hff_ref, hfb_ref,
                  hf_scr, hb_scr, *, TT, T_pad):
    i = pl.program_id(1)                  # time-block index (innermost, "arbitrary")
    H = hf_scr.shape[-1]

    @pl.when(i == 0)
    def _():
        hf_scr[...] = h0f_ref[...]
        hb_scr[...] = h0b_ref[...]

    lengths = len_ref[...]                # (BB, 1) int32, loaded once per block
    whf = whf_ref[...]; bhf = bhf_ref[...]
    whb = whb_ref[...]; bhb = bhb_ref[...]

    def gru_cell(gi, h, wh, bh):
        # gi already holds x @ W_ih + b_ih (hoisted out of the recurrence).
        gh = jnp.dot(h, wh, preferred_element_type=jnp.float32) + bh
        r = jax.nn.sigmoid(gi[:, 0:H] + gh[:, 0:H])
        z = jax.nn.sigmoid(gi[:, H:2 * H] + gh[:, H:2 * H])
        n = jnp.tanh(gi[:, 2 * H:3 * H] + r * gh[:, 2 * H:3 * H])
        return (1.0 - z) * n + z * h

    def step(j, carry):
        # ---- forward direction: global timestep t = i*TT + j ----
        t_f = i * TT + j
        mask_f = t_f < lengths                                    # (BB, 1) bool
        hf_prev = hf_scr[...]
        hf_new = gru_cell(gif_ref[j], hf_prev, whf, bhf)
        hf_upd = jnp.where(mask_f, hf_new, hf_prev)
        hf_scr[...] = hf_upd
        outf_ref[j] = jnp.where(mask_f, hf_upd, 0.0).astype(outf_ref.dtype)

        # ---- backward direction: global timestep T_pad-1 - (i*TT + j) ----
        jr = TT - 1 - j                    # row inside the (time-reversed) block
        t_b = (T_pad - 1) - (i * TT + j)
        mask_b = t_b < lengths
        hb_prev = hb_scr[...]
        hb_new = gru_cell(gib_ref[jr], hb_prev, whb, bhb)
        hb_upd = jnp.where(mask_b, hb_new, hb_prev)
        hb_scr[...] = hb_upd
        outb_ref[jr] = jnp.where(mask_b, hb_upd, 0.0).astype(outb_ref.dtype)
        return carry

    lax.fori_loop(0, TT, step, 0, unroll=True)

    @pl.when(i == pl.num_programs(1) - 1)
    def _():
        hff_ref[...] = hf_scr[...].astype(hff_ref.dtype)
        hfb_ref[...] = hb_scr[...].astype(hfb_ref.dtype)


def _bigru_pallas(gi_f, gi_b, lengths, h0f, h0b, params, *, time_block, batch_block):
    T_pad, B, _ = gi_f.shape
    H = h0f.shape[-1]
    TT = time_block
    BB = batch_block
    G = T_pad // TT
    NB = B // BB

    const_w = lambda b, i: (0, 0)
    per_b2 = lambda b, i: (b, 0)
    fwd_t = lambda b, i: (i, b, 0)
    bwd_t = lambda b, i: (G - 1 - i, b, 0)

    # NOTE: weights/biases/h0/lengths use constant (per-batch-block) index maps,
    # so they are not re-DMA'd across the time axis; they are only double-buffered
    # once each (tiny at these sizes).
    grid_spec = pltpu.PrefetchScalarGridSpec(
        num_scalar_prefetch=0,
        grid=(NB, G),
        in_specs=[
            pl.BlockSpec((BB, 1), per_b2),             # lengths
            pl.BlockSpec((TT, BB, 3 * H), fwd_t),      # precomputed gi (forward)
            pl.BlockSpec((TT, BB, 3 * H), bwd_t),      # precomputed gi (backward)
            pl.BlockSpec((BB, H), per_b2),             # h0 forward
            pl.BlockSpec((BB, H), per_b2),             # h0 backward
            pl.BlockSpec((H, 3 * H), const_w),         # W_hh forward (transposed)
            pl.BlockSpec((1, 3 * H), const_w),         # b_hh forward
            pl.BlockSpec((H, 3 * H), const_w),         # W_hh backward (transposed)
            pl.BlockSpec((1, 3 * H), const_w),         # b_hh backward
        ],
        out_specs=[
            pl.BlockSpec((TT, BB, H), fwd_t),          # per-step forward outputs
            pl.BlockSpec((TT, BB, H), bwd_t),          # per-step backward outputs
            pl.BlockSpec((BB, H), per_b2),             # final hidden forward
            pl.BlockSpec((BB, H), per_b2),             # final hidden backward
        ],
        scratch_shapes=[
            pltpu.VMEM((BB, H), jnp.float32),
            pltpu.VMEM((BB, H), jnp.float32),
        ],
    )

    out_shape = (
        jax.ShapeDtypeStruct((T_pad, B, H), jnp.float32),
        jax.ShapeDtypeStruct((T_pad, B, H), jnp.float32),
        jax.ShapeDtypeStruct((B, H), jnp.float32),
        jax.ShapeDtypeStruct((B, H), jnp.float32),
    )

    kernel = functools.partial(_bigru_kernel, TT=TT, T_pad=T_pad)

    return pl.pallas_call(
        kernel,
        out_shape=out_shape,
        grid_spec=grid_spec,
        compiler_params=pltpu.CompilerParams(
            # batch blocks are independent (megacore on v7x); time is a recurrence.
            dimension_semantics=("parallel", "arbitrary")),
    )(
        lengths, gi_f, gi_b, h0f, h0b,
        params["wh_f"], params["bh_f"], params["wh_b"], params["bh_b"],
    )


def encoder_rnn_forward(input_seqs, input_lengths, params, hidden=None,
                        *, time_block=8, batch_block=None):
    """Equivalent of EncoderRNN.forward (n_layers=1, bidirectional GRU)."""
    emb_table = params["embedding"]
    H = emb_table.shape[-1]
    # Embedding lookup (gather) stays in plain JAX glue.
    emb = jnp.take(emb_table, input_seqs, axis=0).astype(jnp.float32)   # (T, B, H)
    T, B, _ = emb.shape

    # Hoisted input projection: one big (T*B, H) x (H, 6H) matmul for both
    # directions; only h @ W_hh stays inside the recurrent kernel.
    wi_cat = jnp.concatenate([params["wi_f"], params["wi_b"]], axis=1)   # (H, 6H)
    bi_cat = jnp.concatenate([params["bi_f"], params["bi_b"]], axis=1)   # (1, 6H)
    gi = (emb.reshape(T * B, H) @ wi_cat + bi_cat).reshape(T, B, 6 * H)
    gi_f = gi[:, :, :3 * H]
    gi_b = gi[:, :, 3 * H:]

    # Block the time axis; pad T up to a multiple of the time block (padded
    # steps are masked out by the length mask inside the kernel).
    TT = int(min(time_block, T))
    T_pad = ((T + TT - 1) // TT) * TT
    if T_pad != T:
        pad = ((0, T_pad - T), (0, 0), (0, 0))
        gi_f = jnp.pad(gi_f, pad)
        gi_b = jnp.pad(gi_b, pad)

    BB = B if batch_block is None else int(batch_block)
    assert B % BB == 0, "batch must be divisible by batch_block"

    lengths = input_lengths.astype(jnp.int32).reshape(B, 1)

    if hidden is None:
        hidden = jnp.zeros((2, B, H), jnp.float32)
    h0f, h0b = hidden[0], hidden[1]

    outf, outb, hff, hfb = _bigru_pallas(
        gi_f, gi_b, lengths, h0f, h0b, params,
        time_block=TT, batch_block=BB)

    # outputs[:, :, :H] + outputs[:, :, H:]  (sum of the two directions)
    outputs = outf[:T] + outb[:T]
    hidden_out = jnp.stack([hff, hfb], axis=0)
    return outputs, hidden_out


# ------------------------ pure-JAX reference for checking ------------------------
def _ref_forward(input_seqs, input_lengths, params, hidden=None):
    emb = params["embedding"][input_seqs].astype(jnp.float32)
    T, B, H = emb.shape
    mask = (jnp.arange(T)[:, None] < input_lengths[None, :]).astype(jnp.float32)[:, :, None]
    if hidden is None:
        hidden = jnp.zeros((2, B, H), jnp.float32)
    hf, hb = hidden[0], hidden[1]

    def step(x, h, wi, wh, bi, bh):
        gi = x @ wi + bi
        gh = h @ wh + bh
        r = jax.nn.sigmoid(gi[:, 0:H] + gh[:, 0:H])
        z = jax.nn.sigmoid(gi[:, H:2 * H] + gh[:, H:2 * H])
        n = jnp.tanh(gi[:, 2 * H:3 * H] + r * gh[:, 2 * H:3 * H])
        return (1.0 - z) * n + z * h

    out_f, out_b = [], [None] * T
    for t in range(T):
        hn = step(emb[t], hf, params["wi_f"], params["wh_f"], params["bi_f"], params["bh_f"])
        hf = mask[t] * hn + (1.0 - mask[t]) * hf
        out_f.append(mask[t] * hf)
    for t in range(T - 1, -1, -1):
        hn = step(emb[t], hb, params["wi_b"], params["wh_b"], params["bi_b"], params["bh_b"])
        hb = mask[t] * hn + (1.0 - mask[t]) * hb
        out_b[t] = mask[t] * hb
    outputs = jnp.stack(out_f) + jnp.stack(out_b)
    return outputs, jnp.stack([hf, hb], axis=0)


def init_params(key, vocab_size, hidden_size):
    H = hidden_size
    bound = 1.0 / float(np.sqrt(H))
    ks = jax.random.split(key, 9)
    u = lambda k, shape: jax.random.uniform(k, shape, jnp.float32, -bound, bound)
    return {
        # nn.Embedding(vocab, H)-style table
        "embedding": jax.random.normal(ks[0], (vocab_size, H), jnp.float32),
        # GRU weights stored transposed: (H, 3H) = W_ih^T / W_hh^T; biases (1, 3H)
        # (cast to bf16 here for v6e/v7x production shapes; kept f32 for the check)
        "wi_f": u(ks[1], (H, 3 * H)), "wh_f": u(ks[2], (H, 3 * H)),
        "bi_f": u(ks[3], (1, 3 * H)), "bh_f": u(ks[4], (1, 3 * H)),
        "wi_b": u(ks[5], (H, 3 * H)), "wh_b": u(ks[6], (H, 3 * H)),
        "bi_b": u(ks[7], (1, 3 * H)), "bh_b": u(ks[8], (1, 3 * H)),
    }


if __name__ == "__main__":
    # Lane/sublane-aligned small shapes: B multiple of 8, H multiple of 128.
    T, B, H, VOCAB = 11, 8, 128, 50
    key = jax.random.PRNGKey(0)
    kp, kseq = jax.random.split(key)

    params = init_params(kp, VOCAB, H)
    # Sorted-descending lengths, as required by pack_padded_sequence.
    input_lengths = jnp.array([11, 11, 10, 8, 7, 5, 3, 1], dtype=jnp.int32)
    input_seqs = jax.random.randint(kseq, (T, B), 0, VOCAB, dtype=jnp.int32)

    fwd = jax.jit(functools.partial(encoder_rnn_forward, time_block=4))
    outputs, hidden = fwd(input_seqs, input_lengths, params)
    jax.block_until_ready((outputs, hidden))

    ref_out, ref_hid = _ref_forward(input_seqs, input_lengths, params)
    np.testing.assert_allclose(np.asarray(outputs), np.asarray(ref_out), atol=2e-4, rtol=2e-4)
    np.testing.assert_allclose(np.asarray(hidden), np.asarray(ref_hid), atol=2e-4, rtol=2e-4)

    assert outputs.shape == (T, B, H) and hidden.shape == (2, B, H)
    print("KERNEL_OK")
</pallas_src>

<mosaic_0001>
module attributes {stable_mosaic.version = 11 : i64} {
  func.func @_bigru_kernel(%arg0: i32, %arg1: i32, %arg2: memref<8x1xi32, #tpu.memory_space<vmem>>, %arg3: memref<4x8x384xf32, #tpu.memory_space<vmem>>, %arg4: memref<4x8x384xf32, #tpu.memory_space<vmem>>, %arg5: memref<8x128xf32, #tpu.memory_space<vmem>>, %arg6: memref<8x128xf32, #tpu.memory_space<vmem>>, %arg7: memref<128x384xf32, #tpu.memory_space<vmem>>, %arg8: memref<1x384xf32, #tpu.memory_space<vmem>>, %arg9: memref<128x384xf32, #tpu.memory_space<vmem>>, %arg10: memref<1x384xf32, #tpu.memory_space<vmem>>, %arg11: memref<4x8x128xf32, #tpu.memory_space<vmem>>, %arg12: memref<4x8x128xf32, #tpu.memory_space<vmem>>, %arg13: memref<8x128xf32, #tpu.memory_space<vmem>>, %arg14: memref<8x128xf32, #tpu.memory_space<vmem>>, %arg15: memref<8x128xf32, #tpu.memory_space<vmem>>, %arg16: memref<8x128xf32, #tpu.memory_space<vmem>>) attributes {dimension_semantics = [#tpu.dimension_semantics<parallel>, #tpu.dimension_semantics<arbitrary>], iteration_bounds = array<i64: 1, 3>, scalar_prefetch = 0 : i64, scratch_operands = 2 : i64, tpu.core_type = #tpu.core_type<tc>, window_params = [{transform_indices = @transform_0, window_bounds = array<i64: 8, 1>}, {transform_indices = @transform_1, window_bounds = array<i64: 4, 8, 384>}, {transform_indices = @transform_2, window_bounds = array<i64: 4, 8, 384>}, {transform_indices = @transform_3, window_bounds = array<i64: 8, 128>}, {transform_indices = @transform_4, window_bounds = array<i64: 8, 128>}, {pipeline_mode = #tpu.pipeline_mode<synchronous>, transform_indices = @transform_5, window_bounds = array<i64: 128, 384>}, {pipeline_mode = #tpu.pipeline_mode<synchronous>, transform_indices = @transform_6, window_bounds = array<i64: 1, 384>}, {pipeline_mode = #tpu.pipeline_mode<synchronous>, transform_indices = @transform_7, window_bounds = array<i64: 128, 384>}, {pipeline_mode = #tpu.pipeline_mode<synchronous>, transform_indices = @transform_8, window_bounds = array<i64: 1, 384>}, {transform_indices = @transform_9, window_bounds = array<i64: 4, 8, 128>}, {transform_indices = @transform_10, window_bounds = array<i64: 4, 8, 128>}, {transform_indices = @transform_11, window_bounds = array<i64: 8, 128>}, {transform_indices = @transform_12, window_bounds = array<i64: 8, 128>}]} {
    %c0_i32 = arith.constant 0 : i32
    %0 = arith.cmpi eq, %arg1, %c0_i32 : i32
    %1 = arith.extui %0 : i1 to i32
    %c0_i32_0 = arith.constant 0 : i32
    %2 = arith.cmpi ne, %1, %c0_i32_0 : i32
    scf.if %2 {
      %c0_131 = arith.constant 0 : index
      %c0_132 = arith.constant 0 : index
      %411 = vector.load %arg5[%c0_131, %c0_132] : memref<8x128xf32, #tpu.memory_space<vmem>>, vector<8x128xf32>
      %c0_133 = arith.constant 0 : index
      %c0_134 = arith.constant 0 : index
      %412 = vector.load %arg15[%c0_133, %c0_134] : memref<8x128xf32, #tpu.memory_space<vmem>>, vector<8x128xf32>
      tpu.vector_store %arg15[%c0_133, %c0_134], %411 {strides = array<i32>} : memref<8x128xf32, #tpu.memory_space<vmem>>, vector<8x128xf32>,
      %c0_135 = arith.constant 0 : index
      %c0_136 = arith.constant 0 : index
      %413 = vector.load %arg6[%c0_135, %c0_136] : memref<8x128xf32, #tpu.memory_space<vmem>>, vector<8x128xf32>
      %c0_137 = arith.constant 0 : index
      %c0_138 = arith.constant 0 : index
      %414 = vector.load %arg16[%c0_137, %c0_138] : memref<8x128xf32, #tpu.memory_space<vmem>>, vector<8x128xf32>
      tpu.vector_store %arg16[%c0_137, %c0_138], %413 {strides = array<i32>} : memref<8x128xf32, #tpu.memory_space<vmem>>, vector<8x128xf32>,
    } else {
    }
    %c0 = arith.constant 0 : index
    %c0_1 = arith.constant 0 : index
    %3 = vector.load %arg2[%c0, %c0_1] : memref<8x1xi32, #tpu.memory_space<vmem>>, vector<8x1xi32>
    %c0_2 = arith.constant 0 : index
    %c0_3 = arith.constant 0 : index
    %4 = vector.load %arg7[%c0_2, %c0_3] : memref<128x384xf32, #tpu.memory_space<vmem>>, vector<128x384xf32>
    %c0_4 = arith.constant 0 : index
    %c0_5 = arith.constant 0 : index
    %5 = vector.load %arg8[%c0_4, %c0_5] : memref<1x384xf32, #tpu.memory_space<vmem>>, vector<1x384xf32>
    %c0_6 = arith.constant 0 : index
    %c0_7 = arith.constant 0 : index
    %6 = vector.load %arg9[%c0_6, %c0_7] : memref<128x384xf32, #tpu.memory_space<vmem>>, vector<128x384xf32>
    %c0_8 = arith.constant 0 : index
    %c0_9 = arith.constant 0 : index
    %7 = vector.load %arg10[%c0_8, %c0_9] : memref<1x384xf32, #tpu.memory_space<vmem>>, vector<1x384xf32>
    %c0_i32_10 = arith.constant 0 : i32
    %c4_i32 = arith.constant 4 : i32
    %8 = arith.muli %arg1, %c4_i32 : i32
    %9 = arith.addi %8, %c0_i32_10 : i32
    %10 = vector.broadcast %9 : i32 to vector<8x1xi32>
    %11 = arith.cmpi slt, %10, %3 : vector<8x1xi32>
    %c0_11 = arith.constant 0 : index
    %c0_12 = arith.constant 0 : index
    %12 = vector.load %arg15[%c0_11, %c0_12] : memref<8x128xf32, #tpu.memory_space<vmem>>, vector<8x128xf32>
    %13 = arith.index_cast %c0_i32_10 : i32 to index
    %c0_13 = arith.constant 0 : index
    %c0_14 = arith.constant 0 : index
    %14 = vector.load %arg3[%13, %c0_13, %c0_14] : memref<4x8x384xf32, #tpu.memory_space<vmem>>, vector<1x8x384xf32>
    %15 = vector.shape_cast %14 : vector<1x8x384xf32> to vector<8x384xf32>
    %cst = arith.constant dense<0.000000e+00> : vector<8x384xf32>
    %16 = tpu.matmul %12, %4, %cst {dimension_numbers = #tpu.dot_dimension_numbers<[1], [0], [0], [1], [0, 0, 1, 1], [], []>} : vector<8x128xf32>, vector<128x384xf32>, vector<8x384xf32> -> vector<8x384xf32>
    %17 = vector.broadcast %5 : vector<1x384xf32> to vector<8x384xf32>
    %18 = arith.addf %16, %17 : vector<8x384xf32>
    %19 = vector.extract_strided_slice %15 {offsets = [0, 0], sizes = [8, 128], strides = [1, 1]} : vector<8x384xf32> to vector<8x128xf32>
    %20 = vector.extract_strided_slice %18 {offsets = [0, 0], sizes = [8, 128], strides = [1, 1]} : vector<8x384xf32> to vector<8x128xf32>
    %21 = arith.addf %19, %20 : vector<8x128xf32>
    %22 = arith.negf %21 : vector<8x128xf32>
    %23 = math.exp %22 : vector<8x128xf32>
    %cst_15 = arith.constant 1.000000e+00 : f32
    %24 = vector.broadcast %cst_15 : f32 to vector<8x128xf32>
    %25 = arith.addf %24, %23 : vector<8x128xf32>
    %26 = arith.divf %24, %25 : vector<8x128xf32>
    %27 = vector.extract_strided_slice %15 {offsets = [0, 128], sizes = [8, 128], strides = [1, 1]} : vector<8x384xf32> to vector<8x128xf32>
    %28 = vector.extract_strided_slice %18 {offsets = [0, 128], sizes = [8, 128], strides = [1, 1]} : vector<8x384xf32> to vector<8x128xf32>
    %29 = arith.addf %27, %28 : vector<8x128xf32>
    %30 = arith.negf %29 : vector<8x128xf32>
    %31 = math.exp %30 : vector<8x128xf32>
    %cst_16 = arith.constant 1.000000e+00 : f32
    %32 = vector.broadcast %cst_16 : f32 to vector<8x128xf32>
    %33 = arith.addf %32, %31 : vector<8x128xf32>
    %34 = arith.divf %32, %33 : vector<8x128xf32>
    %35 = vector.extract_strided_slice %15 {offsets = [0, 256], sizes = [8, 128], strides = [1, 1]} : vector<8x384xf32> to vector<8x128xf32>
    %36 = vector.extract_strided_slice %18 {offsets = [0, 256], sizes = [8, 128], strides = [1, 1]} : vector<8x384xf32> to vector<8x128xf32>
    %37 = arith.mulf %26, %36 : vector<8x128xf32>
    %38 = arith.addf %35, %37 : vector<8x128xf32>
    %39 = math.tanh %38 : vector<8x128xf32>
    %cst_17 = arith.constant 1.000000e+00 : f32
    %40 = vector.broadcast %cst_17 : f32 to vector<8x128xf32>
    %41 = arith.subf %40, %34 : vector<8x128xf32>
    %42 = arith.mulf %41, %39 : vector<8x128xf32>
    %43 = arith.mulf %34, %12 : vector<8x128xf32>
    %44 = arith.addf %42, %43 : vector<8x128xf32>
    %45 = vector.shape_cast %11 : vector<8x1xi1> to vector<8x1xi1>
    %46 = vector.broadcast %45 : vector<8x1xi1> to vector<8x128xi1>
    %47 = arith.select %46, %44, %12 : vector<8x128xi1>, vector<8x128xf32>
    %c0_18 = arith.constant 0 : index
    %c0_19 = arith.constant 0 : index
    %48 = vector.load %arg15[%c0_18, %c0_19] : memref<8x128xf32, #tpu.memory_space<vmem>>, vector<8x128xf32>
    tpu.vector_store %arg15[%c0_18, %c0_19], %47 {strides = array<i32>} : memref<8x128xf32, #tpu.memory_space<vmem>>, vector<8x128xf32>,
    %cst_20 = arith.constant 0.000000e+00 : f32
    %49 = vector.shape_cast %11 : vector<8x1xi1> to vector<8x1xi1>
    %50 = vector.broadcast %49 : vector<8x1xi1> to vector<8x128xi1>
    %51 = vector.broadcast %cst_20 : f32 to vector<8x128xf32>
    %52 = arith.select %50, %47, %51 : vector<8x128xi1>, vector<8x128xf32>
    %53 = arith.index_cast %c0_i32_10 : i32 to index
    %c0_21 = arith.constant 0 : index
    %c0_22 = arith.constant 0 : index
    %54 = vector.load %arg11[%53, %c0_21, %c0_22] : memref<4x8x128xf32, #tpu.memory_space<vmem>>, vector<1x8x128xf32>
    %55 = vector.shape_cast %54 : vector<1x8x128xf32> to vector<8x128xf32>
    %56 = vector.shape_cast %52 : vector<8x128xf32> to vector<1x8x128xf32>
    tpu.vector_store %arg11[%53, %c0_21, %c0_22], %56 {strides = array<i32>} : memref<4x8x128xf32, #tpu.memory_space<vmem>>, vector<1x8x128xf32>,
    %c3_i32 = arith.constant 3 : i32
    %57 = arith.subi %c3_i32, %c0_i32_10 : i32
    %c4_i32_23 = arith.constant 4 : i32
    %58 = arith.muli %arg1, %c4_i32_23 : i32
    %59 = arith.addi %58, %c0_i32_10 : i32
    %c11_i32 = arith.constant 11 : i32
    %60 = arith.subi %c11_i32, %59 : i32
    %61 = vector.broadcast %60 : i32 to vector<8x1xi32>
    %62 = arith.cmpi slt, %61, %3 : vector<8x1xi32>
    %c0_24 = arith.constant 0 : index
    %c0_25 = arith.constant 0 : index
    %63 = vector.load %arg16[%c0_24, %c0_25] : memref<8x128xf32, #tpu.memory_space<vmem>>, vector<8x128xf32>
    %64 = arith.index_cast %57 : i32 to index
    %c0_26 = arith.constant 0 : index
    %c0_27 = arith.constant 0 : index
    %65 = vector.load %arg4[%64, %c0_26, %c0_27] : memref<4x8x384xf32, #tpu.memory_space<vmem>>, vector<1x8x384xf32>
    %66 = vector.shape_cast %65 : vector<1x8x384xf32> to vector<8x384xf32>
    %cst_28 = arith.constant dense<0.000000e+00> : vector<8x384xf32>
    %67 = tpu.matmul %63, %6, %cst_28 {dimension_numbers = #tpu.dot_dimension_numbers<[1], [0], [0], [1], [0, 0, 1, 1], [], []>} : vector<8x128xf32>, vector<128x384xf32>, vector<8x384xf32> -> vector<8x384xf32>
    %68 = vector.broadcast %7 : vector<1x384xf32> to vector<8x384xf32>
    %69 = arith.addf %67, %68 : vector<8x384xf32>
    %70 = vector.extract_strided_slice %66 {offsets = [0, 0], sizes = [8, 128], strides = [1, 1]} : vector<8x384xf32> to vector<8x128xf32>
    %71 = vector.extract_strided_slice %69 {offsets = [0, 0], sizes = [8, 128], strides = [1, 1]} : vector<8x384xf32> to vector<8x128xf32>
    %72 = arith.addf %70, %71 : vector<8x128xf32>
    %73 = arith.negf %72 : vector<8x128xf32>
    %74 = math.exp %73 : vector<8x128xf32>
    %cst_29 = arith.constant 1.000000e+00 : f32
    %75 = vector.broadcast %cst_29 : f32 to vector<8x128xf32>
    %76 = arith.addf %75, %74 : vector<8x128xf32>
    %77 = arith.divf %75, %76 : vector<8x128xf32>
    %78 = vector.extract_strided_slice %66 {offsets = [0, 128], sizes = [8, 128], strides = [1, 1]} : vector<8x384xf32> to vector<8x128xf32>
    %79 = vector.extract_strided_slice %69 {offsets = [0, 128], sizes = [8, 128], strides = [1, 1]} : vector<8x384xf32> to vector<8x128xf32>
    %80 = arith.addf %78, %79 : vector<8x128xf32>
    %81 = arith.negf %80 : vector<8x128xf32>
    %82 = math.exp %81 : vector<8x128xf32>
    %cst_30 = arith.constant 1.000000e+00 : f32
    %83 = vector.broadcast %cst_30 : f32 to vector<8x128xf32>
    %84 = arith.addf %83, %82 : vector<8x128xf32>
    %85 = arith.divf %83, %84 : vector<8x128xf32>
    %86 = vector.extract_strided_slice %66 {offsets = [0, 256], sizes = [8, 128], strides = [1, 1]} : vector<8x384xf32> to vector<8x128xf32>
    %87 = vector.extract_strided_slice %69 {offsets = [0, 256], sizes = [8, 128], strides = [1, 1]} : vector<8x384xf32> to vector<8x128xf32>
    %88 = arith.mulf %77, %87 : vector<8x128xf32>
    %89 = arith.addf %86, %88 : vector<8x128xf32>
    %90 = math.tanh %89 : vector<8x128xf32>
    %cst_31 = arith.constant 1.000000e+00 : f32
    %91 = vector.broadcast %cst_31 : f32 to vector<8x128xf32>
    %92 = arith.subf %91, %85 : vector<8x128xf32>
    %93 = arith.mulf %92, %90 : vector<8x128xf32>
    %94 = arith.mulf %85, %63 : vector<8x128xf32>
    %95 = arith.addf %93, %94 : vector<8x128xf32>
    %96 = vector.shape_cast %62 : vector<8x1xi1> to vector<8x1xi1>
    %97 = vector.broadcast %96 : vector<8x1xi1> to vector<8x128xi1>
    %98 = arith.select %97, %95, %63 : vector<8x128xi1>, vector<8x128xf32>
    %c0_32 = arith.constant 0 : index
    %c0_33 = arith.constant 0 : index
    %99 = vector.load %arg16[%c0_32, %c0_33] : memref<8x128xf32, #tpu.memory_space<vmem>>, vector<8x128xf32>
    tpu.vector_store %arg16[%c0_32, %c0_33], %98 {strides = array<i32>} : memref<8x128xf32, #tpu.memory_space<vmem>>, vector<8x128xf32>,
    %cst_34 = arith.constant 0.000000e+00 : f32
    %100 = vector.shape_cast %62 : vector<8x1xi1> to vector<8x1xi1>
    %101 = vector.broadcast %100 : vector<8x1xi1> to vector<8x128xi1>
    %102 = vector.broadcast %cst_34 : f32 to vector<8x128xf32>
    %103 = arith.select %101, %98, %102 : vector<8x128xi1>, vector<8x128xf32>
    %104 = arith.index_cast %57 : i32 to index
    %c0_35 = arith.constant 0 : index
    %c0_36 = arith.constant 0 : index
    %105 = vector.load %arg12[%104, %c0_35, %c0_36] : memref<4x8x128xf32, #tpu.memory_space<vmem>>, vector<1x8x128xf32>
    %106 = vector.shape_cast %105 : vector<1x8x128xf32> to vector<8x128xf32>
    %107 = vector.shape_cast %103 : vector<8x128xf32> to vector<1x8x128xf32>
    tpu.vector_store %arg12[%104, %c0_35, %c0_36], %107 {strides = array<i32>} : memref<4x8x128xf32, #tpu.memory_space<vmem>>, vector<1x8x128xf32>,
    %c1_i32 = arith.constant 1 : i32
    %c4_i32_37 = arith.constant 4 : i32
    %108 = arith.muli %arg1, %c4_i32_37 : i32
    %109 = arith.addi %108, %c1_i32 : i32
    %110 = vector.broadcast %109 : i32 to vector<8x1xi32>
    %111 = arith.cmpi slt, %110, %3 : vector<8x1xi32>
    %c0_38 = arith.constant 0 : index
    %c0_39 = arith.constant 0 : index
    %112 = vector.load %arg15[%c0_38, %c0_39] : memref<8x128xf32, #tpu.memory_space<vmem>>, vector<8x128xf32>
    %113 = arith.index_cast %c1_i32 : i32 to index
    %c0_40 = arith.constant 0 : index
    %c0_41 = arith.constant 0 : index
    %114 = vector.load %arg3[%113, %c0_40, %c0_41] : memref<4x8x384xf32, #tpu.memory_space<vmem>>, vector<1x8x384xf32>
    %115 = vector.shape_cast %114 : vector<1x8x384xf32> to vector<8x384xf32>
    %cst_42 = arith.constant dense<0.000000e+00> : vector<8x384xf32>
    %116 = tpu.matmul %112, %4, %cst_42 {dimension_numbers = #tpu.dot_dimension_numbers<[1], [0], [0], [1], [0, 0, 1, 1], [], []>} : vector<8x128xf32>, vector<128x384xf32>, vector<8x384xf32> -> vector<8x384xf32>
    %117 = vector.broadcast %5 : vector<1x384xf32> to vector<8x384xf32>
    %118 = arith.addf %116, %117 : vector<8x384xf32>
    %119 = vector.extract_strided_slice %115 {offsets = [0, 0], sizes = [8, 128], strides = [1, 1]} : vector<8x384xf32> to vector<8x128xf32>
    %120 = vector.extract_strided_slice %118 {offsets = [0, 0], sizes = [8, 128], strides = [1, 1]} : vector<8x384xf32> to vector<8x128xf32>
    %121 = arith.addf %119, %120 : vector<8x128xf32>
    %122 = arith.negf %121 : vector<8x128xf32>
    %123 = math.exp %122 : vector<8x128xf32>
    %cst_43 = arith.constant 1.000000e+00 : f32
    %124 = vector.broadcast %cst_43 : f32 to vector<8x128xf32>
    %125 = arith.addf %124, %123 : vector<8x128xf32>
    %126 = arith.divf %124, %125 : vector<8x128xf32>
    %127 = vector.extract_strided_slice %115 {offsets = [0, 128], sizes = [8, 128], strides = [1, 1]} : vector<8x384xf32> to vector<8x128xf32>
    %128 = vector.extract_strided_slice %118 {offsets = [0, 128], sizes = [8, 128], strides = [1, 1]} : vector<8x384xf32> to vector<8x128xf32>
    %129 = arith.addf %127, %128 : vector<8x128xf32>
    %130 = arith.negf %129 : vector<8x128xf32>
    %131 = math.exp %130 : vector<8x128xf32>
    %cst_44 = arith.constant 1.000000e+00 : f32
    %132 = vector.broadcast %cst_44 : f32 to vector<8x128xf32>
    %133 = arith.addf %132, %131 : vector<8x128xf32>
    %134 = arith.divf %132, %133 : vector<8x128xf32>
    %135 = vector.extract_strided_slice %115 {offsets = [0, 256], sizes = [8, 128], strides = [1, 1]} : vector<8x384xf32> to vector<8x128xf32>
    %136 = vector.extract_strided_slice %118 {offsets = [0, 256], sizes = [8, 128], strides = [1, 1]} : vector<8x384xf32> to vector<8x128xf32>
    %137 = arith.mulf %126, %136 : vector<8x128xf32>
    %138 = arith.addf %135, %137 : vector<8x128xf32>
    %139 = math.tanh %138 : vector<8x128xf32>
    %cst_45 = arith.constant 1.000000e+00 : f32
    %140 = vector.broadcast %cst_45 : f32 to vector<8x128xf32>
    %141 = arith.subf %140, %134 : vector<8x128xf32>
    %142 = arith.mulf %141, %139 : vector<8x128xf32>
    %143 = arith.mulf %134, %112 : vector<8x128xf32>
    %144 = arith.addf %142, %143 : vector<8x128xf32>
    %145 = vector.shape_cast %111 : vector<8x1xi1> to vector<8x1xi1>
    %146 = vector.broadcast %145 : vector<8x1xi1> to vector<8x128xi1>
    %147 = arith.select %146, %144, %112 : vector<8x128xi1>, vector<8x128xf32>
    %c0_46 = arith.constant 0 : index
    %c0_47 = arith.constant 0 : index
    %148 = vector.load %arg15[%c0_46, %c0_47] : memref<8x128xf32, #tpu.memory_space<vmem>>, vector<8x128xf32>
    tpu.vector_store %arg15[%c0_46, %c0_47], %147 {strides = array<i32>} : memref<8x128xf32, #tpu.memory_space<vmem>>, vector<8x128xf32>,
    %cst_48 = arith.constant 0.000000e+00 : f32
    %149 = vector.shape_cast %111 : vector<8x1xi1> to vector<8x1xi1>
    %150 = vector.broadcast %149 : vector<8x1xi1> to vector<8x128xi1>
    %151 = vector.broadcast %cst_48 : f32 to vector<8x128xf32>
    %152 = arith.select %150, %147, %151 : vector<8x128xi1>, vector<8x128xf32>
    %153 = arith.index_cast %c1_i32 : i32 to index
    %c0_49 = arith.constant 0 : index
    %c0_50 = arith.constant 0 : index
    %154 = vector.load %arg11[%153, %c0_49, %c0_50] : memref<4x8x128xf32, #tpu.memory_space<vmem>>, vector<1x8x128xf32>
    %155 = vector.shape_cast %154 : vector<1x8x128xf32> to vector<8x128xf32>
    %156 = vector.shape_cast %152 : vector<8x128xf32> to vector<1x8x128xf32>
    tpu.vector_store %arg11[%153, %c0_49, %c0_50], %156 {strides = array<i32>} : memref<4x8x128xf32, #tpu.memory_space<vmem>>, vector<1x8x128xf32>,
    %c3_i32_51 = arith.constant 3 : i32
    %157 = arith.subi %c3_i32_51, %c1_i32 : i32
    %c4_i32_52 = arith.constant 4 : i32
    %158 = arith.muli %arg1, %c4_i32_52 : i32
    %159 = arith.addi %158, %c1_i32 : i32
    %c11_i32_53 = arith.constant 11 : i32
    %160 = arith.subi %c11_i32_53, %159 : i32
    %161 = vector.broadcast %160 : i32 to vector<8x1xi32>
    %162 = arith.cmpi slt, %161, %3 : vector<8x1xi32>
    %c0_54 = arith.constant 0 : index
    %c0_55 = arith.constant 0 : index
    %163 = vector.load %arg16[%c0_54, %c0_55] : memref<8x128xf32, #tpu.memory_space<vmem>>, vector<8x128xf32>
    %164 = arith.index_cast %157 : i32 to index
    %c0_56 = arith.constant 0 : index
    %c0_57 = arith.constant 0 : index
    %165 = vector.load %arg4[%164, %c0_56, %c0_57] : memref<4x8x384xf32, #tpu.memory_space<vmem>>, vector<1x8x384xf32>
    %166 = vector.shape_cast %165 : vector<1x8x384xf32> to vector<8x384xf32>
    %cst_58 = arith.constant dense<0.000000e+00> : vector<8x384xf32>
    %167 = tpu.matmul %163, %6, %cst_58 {dimension_numbers = #tpu.dot_dimension_numbers<[1], [0], [0], [1], [0, 0, 1, 1], [], []>} : vector<8x128xf32>, vector<128x384xf32>, vector<8x384xf32> -> vector<8x384xf32>
    %168 = vector.broadcast %7 : vector<1x384xf32> to vector<8x384xf32>
    %169 = arith.addf %167, %168 : vector<8x384xf32>
    %170 = vector.extract_strided_slice %166 {offsets = [0, 0], sizes = [8, 128], strides = [1, 1]} : vector<8x384xf32> to vector<8x128xf32>
    %171 = vector.extract_strided_slice %169 {offsets = [0, 0], sizes = [8, 128], strides = [1, 1]} : vector<8x384xf32> to vector<8x128xf32>
    %172 = arith.addf %170, %171 : vector<8x128xf32>
    %173 = arith.negf %172 : vector<8x128xf32>
    %174 = math.exp %173 : vector<8x128xf32>
    %cst_59 = arith.constant 1.000000e+00 : f32
    %175 = vector.broadcast %cst_59 : f32 to vector<8x128xf32>
    %176 = arith.addf %175, %174 : vector<8x128xf32>
    %177 = arith.divf %175, %176 : vector<8x128xf32>
    %178 = vector.extract_strided_slice %166 {offsets = [0, 128], sizes = [8, 128], strides = [1, 1]} : vector<8x384xf32> to vector<8x128xf32>
    %179 = vector.extract_strided_slice %169 {offsets = [0, 128], sizes = [8, 128], strides = [1, 1]} : vector<8x384xf32> to vector<8x128xf32>
    %180 = arith.addf %178, %179 : vector<8x128xf32>
    %181 = arith.negf %180 : vector<8x128xf32>
    %182 = math.exp %181 : vector<8x128xf32>
    %cst_60 = arith.constant 1.000000e+00 : f32
    %183 = vector.broadcast %cst_60 : f32 to vector<8x128xf32>
    %184 = arith.addf %183, %182 : vector<8x128xf32>
    %185 = arith.divf %183, %184 : vector<8x128xf32>
    %186 = vector.extract_strided_slice %166 {offsets = [0, 256], sizes = [8, 128], strides = [1, 1]} : vector<8x384xf32> to vector<8x128xf32>
    %187 = vector.extract_strided_slice %169 {offsets = [0, 256], sizes = [8, 128], strides = [1, 1]} : vector<8x384xf32> to vector<8x128xf32>
    %188 = arith.mulf %177, %187 : vector<8x128xf32>
    %189 = arith.addf %186, %188 : vector<8x128xf32>
    %190 = math.tanh %189 : vector<8x128xf32>
    %cst_61 = arith.constant 1.000000e+00 : f32
    %191 = vector.broadcast %cst_61 : f32 to vector<8x128xf32>
    %192 = arith.subf %191, %185 : vector<8x128xf32>
    %193 = arith.mulf %192, %190 : vector<8x128xf32>
    %194 = arith.mulf %185, %163 : vector<8x128xf32>
    %195 = arith.addf %193, %194 : vector<8x128xf32>
    %196 = vector.shape_cast %162 : vector<8x1xi1> to vector<8x1xi1>
    %197 = vector.broadcast %196 : vector<8x1xi1> to vector<8x128xi1>
    %198 = arith.select %197, %195, %163 : vector<8x128xi1>, vector<8x128xf32>
    %c0_62 = arith.constant 0 : index
    %c0_63 = arith.constant 0 : index
    %199 = vector.load %arg16[%c0_62, %c0_63] : memref<8x128xf32, #tpu.memory_space<vmem>>, vector<8x128xf32>
    tpu.vector_store %arg16[%c0_62, %c0_63], %198 {strides = array<i32>} : memref<8x128xf32, #tpu.memory_space<vmem>>, vector<8x128xf32>,
    %cst_64 = arith.constant 0.000000e+00 : f32
    %200 = vector.shape_cast %162 : vector<8x1xi1> to vector<8x1xi1>
    %201 = vector.broadcast %200 : vector<8x1xi1> to vector<8x128xi1>
    %202 = vector.broadcast %cst_64 : f32 to vector<8x128xf32>
    %203 = arith.select %201, %198, %202 : vector<8x128xi1>, vector<8x128xf32>
    %204 = arith.index_cast %157 : i32 to index
    %c0_65 = arith.constant 0 : index
    %c0_66 = arith.constant 0 : index
    %205 = vector.load %arg12[%204, %c0_65, %c0_66] : memref<4x8x128xf32, #tpu.memory_space<vmem>>, vector<1x8x128xf32>
    %206 = vector.shape_cast %205 : vector<1x8x128xf32> to vector<8x128xf32>
    %207 = vector.shape_cast %203 : vector<8x128xf32> to vector<1x8x128xf32>
    tpu.vector_store %arg12[%204, %c0_65, %c0_66], %207 {strides = array<i32>} : memref<4x8x128xf32, #tpu.memory_space<vmem>>, vector<1x8x128xf32>,
    %c2_i32 = arith.constant 2 : i32
    %c4_i32_67 = arith.constant 4 : i32
    %208 = arith.muli %arg1, %c4_i32_67 : i32
    %209 = arith.addi %208, %c2_i32 : i32
    %210 = vector.broadcast %209 : i32 to vector<8x1xi32>
    %211 = arith.cmpi slt, %210, %3 : vector<8x1xi32>
    %c0_68 = arith.constant 0 : index
    %c0_69 = arith.constant 0 : index
    %212 = vector.load %arg15[%c0_68, %c0_69] : memref<8x128xf32, #tpu.memory_space<vmem>>, vector<8x128xf32>
    %213 = arith.index_cast %c2_i32 : i32 to index
    %c0_70 = arith.constant 0 : index
    %c0_71 = arith.constant 0 : index
    %214 = vector.load %arg3[%213, %c0_70, %c0_71] : memref<4x8x384xf32, #tpu.memory_space<vmem>>, vector<1x8x384xf32>
    %215 = vector.shape_cast %214 : vector<1x8x384xf32> to vector<8x384xf32>
    %cst_72 = arith.constant dense<0.000000e+00> : vector<8x384xf32>
    %216 = tpu.matmul %212, %4, %cst_72 {dimension_numbers = #tpu.dot_dimension_numbers<[1], [0], [0], [1], [0, 0, 1, 1], [], []>} : vector<8x128xf32>, vector<128x384xf32>, vector<8x384xf32> -> vector<8x384xf32>
    %217 = vector.broadcast %5 : vector<1x384xf32> to vector<8x384xf32>
    %218 = arith.addf %216, %217 : vector<8x384xf32>
    %219 = vector.extract_strided_slice %215 {offsets = [0, 0], sizes = [8, 128], strides = [1, 1]} : vector<8x384xf32> to vector<8x128xf32>
    %220 = vector.extract_strided_slice %218 {offsets = [0, 0], sizes = [8, 128], strides = [1, 1]} : vector<8x384xf32> to vector<8x128xf32>
    %221 = arith.addf %219, %220 : vector<8x128xf32>
    %222 = arith.negf %221 : vector<8x128xf32>
    %223 = math.exp %222 : vector<8x128xf32>
    %cst_73 = arith.constant 1.000000e+00 : f32
    %224 = vector.broadcast %cst_73 : f32 to vector<8x128xf32>
    %225 = arith.addf %224, %223 : vector<8x128xf32>
    %226 = arith.divf %224, %225 : vector<8x128xf32>
    %227 = vector.extract_strided_slice %215 {offsets = [0, 128], sizes = [8, 128], strides = [1, 1]} : vector<8x384xf32> to vector<8x128xf32>
    %228 = vector.extract_strided_slice %218 {offsets = [0, 128], sizes = [8, 128], strides = [1, 1]} : vector<8x384xf32> to vector<8x128xf32>
    %229 = arith.addf %227, %228 : vector<8x128xf32>
    %230 = arith.negf %229 : vector<8x128xf32>
    %231 = math.exp %230 : vector<8x128xf32>
    %cst_74 = arith.constant 1.000000e+00 : f32
    %232 = vector.broadcast %cst_74 : f32 to vector<8x128xf32>
    %233 = arith.addf %232, %231 : vector<8x128xf32>
    %234 = arith.divf %232, %233 : vector<8x128xf32>
    %235 = vector.extract_strided_slice %215 {offsets = [0, 256], sizes = [8, 128], strides = [1, 1]} : vector<8x384xf32> to vector<8x128xf32>
    %236 = vector.extract_strided_slice %218 {offsets = [0, 256], sizes = [8, 128], strides = [1, 1]} : vector<8x384xf32> to vector<8x128xf32>
    %237 = arith.mulf %226, %236 : vector<8x128xf32>
    %238 = arith.addf %235, %237 : vector<8x128xf32>
    %239 = math.tanh %238 : vector<8x128xf32>
    %cst_75 = arith.constant 1.000000e+00 : f32
    %240 = vector.broadcast %cst_75 : f32 to vector<8x128xf32>
    %241 = arith.subf %240, %234 : vector<8x128xf32>
    %242 = arith.mulf %241, %239 : vector<8x128xf32>
    %243 = arith.mulf %234, %212 : vector<8x128xf32>
    %244 = arith.addf %242, %243 : vector<8x128xf32>
    %245 = vector.shape_cast %211 : vector<8x1xi1> to vector<8x1xi1>
    %246 = vector.broadcast %245 : vector<8x1xi1> to vector<8x128xi1>
    %247 = arith.select %246, %244, %212 : vector<8x128xi1>, vector<8x128xf32>
    %c0_76 = arith.constant 0 : index
    %c0_77 = arith.constant 0 : index
    %248 = vector.load %arg15[%c0_76, %c0_77] : memref<8x128xf32, #tpu.memory_space<vmem>>, vector<8x128xf32>
    tpu.vector_store %arg15[%c0_76, %c0_77], %247 {strides = array<i32>} : memref<8x128xf32, #tpu.memory_space<vmem>>, vector<8x128xf32>,
    %cst_78 = arith.constant 0.000000e+00 : f32
    %249 = vector.shape_cast %211 : vector<8x1xi1> to vector<8x1xi1>
    %250 = vector.broadcast %249 : vector<8x1xi1> to vector<8x128xi1>
    %251 = vector.broadcast %cst_78 : f32 to vector<8x128xf32>
    %252 = arith.select %250, %247, %251 : vector<8x128xi1>, vector<8x128xf32>
    %253 = arith.index_cast %c2_i32 : i32 to index
    %c0_79 = arith.constant 0 : index
    %c0_80 = arith.constant 0 : index
    %254 = vector.load %arg11[%253, %c0_79, %c0_80] : memref<4x8x128xf32, #tpu.memory_space<vmem>>, vector<1x8x128xf32>
    %255 = vector.shape_cast %254 : vector<1x8x128xf32> to vector<8x128xf32>
    %256 = vector.shape_cast %252 : vector<8x128xf32> to vector<1x8x128xf32>
    tpu.vector_store %arg11[%253, %c0_79, %c0_80], %256 {strides = array<i32>} : memref<4x8x128xf32, #tpu.memory_space<vmem>>, vector<1x8x128xf32>,
    %c3_i32_81 = arith.constant 3 : i32
    %257 = arith.subi %c3_i32_81, %c2_i32 : i32
    %c4_i32_82 = arith.constant 4 : i32
    %258 = arith.muli %arg1, %c4_i32_82 : i32
    %259 = arith.addi %258, %c2_i32 : i32
    %c11_i32_83 = arith.constant 11 : i32
    %260 = arith.subi %c11_i32_83, %259 : i32
    %261 = vector.broadcast %260 : i32 to vector<8x1xi32>
    %262 = arith.cmpi slt, %261, %3 : vector<8x1xi32>
    %c0_84 = arith.constant 0 : index
    %c0_85 = arith.constant 0 : index
    %263 = vector.load %arg16[%c0_84, %c0_85] : memref<8x128xf32, #tpu.memory_space<vmem>>, vector<8x128xf32>
    %264 = arith.index_cast %257 : i32 to index
    %c0_86 = arith.constant 0 : index
    %c0_87 = arith.constant 0 : index
    %265 = vector.load %arg4[%264, %c0_86, %c0_87] : memref<4x8x384xf32, #tpu.memory_space<vmem>>, vector<1x8x384xf32>
    %266 = vector.shape_cast %265 : vector<1x8x384xf32> to vector<8x384xf32>
    %cst_88 = arith.constant dense<0.000000e+00> : vector<8x384xf32>
    %267 = tpu.matmul %263, %6, %cst_88 {dimension_numbers = #tpu.dot_dimension_numbers<[1], [0], [0], [1], [0, 0, 1, 1], [], []>} : vector<8x128xf32>, vector<128x384xf32>, vector<8x384xf32> -> vector<8x384xf32>
    %268 = vector.broadcast %7 : vector<1x384xf32> to vector<8x384xf32>
    %269 = arith.addf %267, %268 : vector<8x384xf32>
    %270 = vector.extract_strided_slice %266 {offsets = [0, 0], sizes = [8, 128], strides = [1, 1]} : vector<8x384xf32> to vector<8x128xf32>
    %271 = vector.extract_strided_slice %269 {offsets = [0, 0], sizes = [8, 128], strides = [1, 1]} : vector<8x384xf32> to vector<8x128xf32>
    %272 = arith.addf %270, %271 : vector<8x128xf32>
    %273 = arith.negf %272 : vector<8x128xf32>
    %274 = math.exp %273 : vector<8x128xf32>
    %cst_89 = arith.constant 1.000000e+00 : f32
    %275 = vector.broadcast %cst_89 : f32 to vector<8x128xf32>
    %276 = arith.addf %275, %274 : vector<8x128xf32>
    %277 = arith.divf %275, %276 : vector<8x128xf32>
    %278 = vector.extract_strided_slice %266 {offsets = [0, 128], sizes = [8, 128], strides = [1, 1]} : vector<8x384xf32> to vector<8x128xf32>
    %279 = vector.extract_strided_slice %269 {offsets = [0, 128], sizes = [8, 128], strides = [1, 1]} : vector<8x384xf32> to vector<8x128xf32>
    %280 = arith.addf %278, %279 : vector<8x128xf32>
    %281 = arith.negf %280 : vector<8x128xf32>
    %282 = math.exp %281 : vector<8x128xf32>
    %cst_90 = arith.constant 1.000000e+00 : f32
    %283 = vector.broadcast %cst_90 : f32 to vector<8x128xf32>
    %284 = arith.addf %283, %282 : vector<8x128xf32>
    %285 = arith.divf %283, %284 : vector<8x128xf32>
    %286 = vector.extract_strided_slice %266 {offsets = [0, 256], sizes = [8, 128], strides = [1, 1]} : vector<8x384xf32> to vector<8x128xf32>
    %287 = vector.extract_strided_slice %269 {offsets = [0, 256], sizes = [8, 128], strides = [1, 1]} : vector<8x384xf32> to vector<8x128xf32>
    %288 = arith.mulf %277, %287 : vector<8x128xf32>
    %289 = arith.addf %286, %288 : vector<8x128xf32>
    %290 = math.tanh %289 : vector<8x128xf32>
    %cst_91 = arith.constant 1.000000e+00 : f32
    %291 = vector.broadcast %cst_91 : f32 to vector<8x128xf32>
    %292 = arith.subf %291, %285 : vector<8x128xf32>
    %293 = arith.mulf %292, %290 : vector<8x128xf32>
    %294 = arith.mulf %285, %263 : vector<8x128xf32>
    %295 = arith.addf %293, %294 : vector<8x128xf32>
    %296 = vector.shape_cast %262 : vector<8x1xi1> to vector<8x1xi1>
    %297 = vector.broadcast %296 : vector<8x1xi1> to vector<8x128xi1>
    %298 = arith.select %297, %295, %263 : vector<8x128xi1>, vector<8x128xf32>
    %c0_92 = arith.constant 0 : index
    %c0_93 = arith.constant 0 : index
    %299 = vector.load %arg16[%c0_92, %c0_93] : memref<8x128xf32, #tpu.memory_space<vmem>>, vector<8x128xf32>
    tpu.vector_store %arg16[%c0_92, %c0_93], %298 {strides = array<i32>} : memref<8x128xf32, #tpu.memory_space<vmem>>, vector<8x128xf32>,
    %cst_94 = arith.constant 0.000000e+00 : f32
    %300 = vector.shape_cast %262 : vector<8x1xi1> to vector<8x1xi1>
    %301 = vector.broadcast %300 : vector<8x1xi1> to vector<8x128xi1>
    %302 = vector.broadcast %cst_94 : f32 to vector<8x128xf32>
    %303 = arith.select %301, %298, %302 : vector<8x128xi1>, vector<8x128xf32>
    %304 = arith.index_cast %257 : i32 to index
    %c0_95 = arith.constant 0 : index
    %c0_96 = arith.constant 0 : index
    %305 = vector.load %arg12[%304, %c0_95, %c0_96] : memref<4x8x128xf32, #tpu.memory_space<vmem>>, vector<1x8x128xf32>
    %306 = vector.shape_cast %305 : vector<1x8x128xf32> to vector<8x128xf32>
    %307 = vector.shape_cast %303 : vector<8x128xf32> to vector<1x8x128xf32>
    tpu.vector_store %arg12[%304, %c0_95, %c0_96], %307 {strides = array<i32>} : memref<4x8x128xf32, #tpu.memory_space<vmem>>, vector<1x8x128xf32>,
    %c3_i32_97 = arith.constant 3 : i32
    %c4_i32_98 = arith.constant 4 : i32
    %308 = arith.muli %arg1, %c4_i32_98 : i32
    %309 = arith.addi %308, %c3_i32_97 : i32
    %310 = vector.broadcast %309 : i32 to vector<8x1xi32>
    %311 = arith.cmpi slt, %310, %3 : vector<8x1xi32>
    %c0_99 = arith.constant 0 : index
    %c0_100 = arith.constant 0 : index
    %312 = vector.load %arg15[%c0_99, %c0_100] : memref<8x128xf32, #tpu.memory_space<vmem>>, vector<8x128xf32>
    %313 = arith.index_cast %c3_i32_97 : i32 to index
    %c0_101 = arith.constant 0 : index
    %c0_102 = arith.constant 0 : index
    %314 = vector.load %arg3[%313, %c0_101, %c0_102] : memref<4x8x384xf32, #tpu.memory_space<vmem>>, vector<1x8x384xf32>
    %315 = vector.shape_cast %314 : vector<1x8x384xf32> to vector<8x384xf32>
    %cst_103 = arith.constant dense<0.000000e+00> : vector<8x384xf32>
    %316 = tpu.matmul %312, %4, %cst_103 {dimension_numbers = #tpu.dot_dimension_numbers<[1], [0], [0], [1], [0, 0, 1, 1], [], []>} : vector<8x128xf32>, vector<128x384xf32>, vector<8x384xf32> -> vector<8x384xf32>
    %317 = vector.broadcast %5 : vector<1x384xf32> to vector<8x384xf32>
    %318 = arith.addf %316, %317 : vector<8x384xf32>
    %319 = vector.extract_strided_slice %315 {offsets = [0, 0], sizes = [8, 128], strides = [1, 1]} : vector<8x384xf32> to vector<8x128xf32>
    %320 = vector.extract_strided_slice %318 {offsets = [0, 0], sizes = [8, 128], strides = [1, 1]} : vector<8x384xf32> to vector<8x128xf32>
    %321 = arith.addf %319, %320 : vector<8x128xf32>
    %322 = arith.negf %321 : vector<8x128xf32>
    %323 = math.exp %322 : vector<8x128xf32>
    %cst_104 = arith.constant 1.000000e+00 : f32
    %324 = vector.broadcast %cst_104 : f32 to vector<8x128xf32>
    %325 = arith.addf %324, %323 : vector<8x128xf32>
    %326 = arith.divf %324, %325 : vector<8x128xf32>
    %327 = vector.extract_strided_slice %315 {offsets = [0, 128], sizes = [8, 128], strides = [1, 1]} : vector<8x384xf32> to vector<8x128xf32>
    %328 = vector.extract_strided_slice %318 {offsets = [0, 128], sizes = [8, 128], strides = [1, 1]} : vector<8x384xf32> to vector<8x128xf32>
    %329 = arith.addf %327, %328 : vector<8x128xf32>
    %330 = arith.negf %329 : vector<8x128xf32>
    %331 = math.exp %330 : vector<8x128xf32>
    %cst_105 = arith.constant 1.000000e+00 : f32
    %332 = vector.broadcast %cst_105 : f32 to vector<8x128xf32>
    %333 = arith.addf %332, %331 : vector<8x128xf32>
    %334 = arith.divf %332, %333 : vector<8x128xf32>
    %335 = vector.extract_strided_slice %315 {offsets = [0, 256], sizes = [8, 128], strides = [1, 1]} : vector<8x384xf32> to vector<8x128xf32>
    %336 = vector.extract_strided_slice %318 {offsets = [0, 256], sizes = [8, 128], strides = [1, 1]} : vector<8x384xf32> to vector<8x128xf32>
    %337 = arith.mulf %326, %336 : vector<8x128xf32>
    %338 = arith.addf %335, %337 : vector<8x128xf32>
    %339 = math.tanh %338 : vector<8x128xf32>
    %cst_106 = arith.constant 1.000000e+00 : f32
    %340 = vector.broadcast %cst_106 : f32 to vector<8x128xf32>
    %341 = arith.subf %340, %334 : vector<8x128xf32>
    %342 = arith.mulf %341, %339 : vector<8x128xf32>
    %343 = arith.mulf %334, %312 : vector<8x128xf32>
    %344 = arith.addf %342, %343 : vector<8x128xf32>
    %345 = vector.shape_cast %311 : vector<8x1xi1> to vector<8x1xi1>
    %346 = vector.broadcast %345 : vector<8x1xi1> to vector<8x128xi1>
    %347 = arith.select %346, %344, %312 : vector<8x128xi1>, vector<8x128xf32>
    %c0_107 = arith.constant 0 : index
    %c0_108 = arith.constant 0 : index
    %348 = vector.load %arg15[%c0_107, %c0_108] : memref<8x128xf32, #tpu.memory_space<vmem>>, vector<8x128xf32>
    tpu.vector_store %arg15[%c0_107, %c0_108], %347 {strides = array<i32>} : memref<8x128xf32, #tpu.memory_space<vmem>>, vector<8x128xf32>,
    %cst_109 = arith.constant 0.000000e+00 : f32
    %349 = vector.shape_cast %311 : vector<8x1xi1> to vector<8x1xi1>
    %350 = vector.broadcast %349 : vector<8x1xi1> to vector<8x128xi1>
    %351 = vector.broadcast %cst_109 : f32 to vector<8x128xf32>
    %352 = arith.select %350, %347, %351 : vector<8x128xi1>, vector<8x128xf32>
    %353 = arith.index_cast %c3_i32_97 : i32 to index
    %c0_110 = arith.constant 0 : index
    %c0_111 = arith.constant 0 : index
    %354 = vector.load %arg11[%353, %c0_110, %c0_111] : memref<4x8x128xf32, #tpu.memory_space<vmem>>, vector<1x8x128xf32>
    %355 = vector.shape_cast %354 : vector<1x8x128xf32> to vector<8x128xf32>
    %356 = vector.shape_cast %352 : vector<8x128xf32> to vector<1x8x128xf32>
    tpu.vector_store %arg11[%353, %c0_110, %c0_111], %356 {strides = array<i32>} : memref<4x8x128xf32, #tpu.memory_space<vmem>>, vector<1x8x128xf32>,
    %c3_i32_112 = arith.constant 3 : i32
    %357 = arith.subi %c3_i32_112, %c3_i32_97 : i32
    %c4_i32_113 = arith.constant 4 : i32
    %358 = arith.muli %arg1, %c4_i32_113 : i32
    %359 = arith.addi %358, %c3_i32_97 : i32
    %c11_i32_114 = arith.constant 11 : i32
    %360 = arith.subi %c11_i32_114, %359 : i32
    %361 = vector.broadcast %360 : i32 to vector<8x1xi32>
    %362 = arith.cmpi slt, %361, %3 : vector<8x1xi32>
    %c0_115 = arith.constant 0 : index
    %c0_116 = arith.constant 0 : index
    %363 = vector.load %arg16[%c0_115, %c0_116] : memref<8x128xf32, #tpu.memory_space<vmem>>, vector<8x128xf32>
    %364 = arith.index_cast %357 : i32 to index
    %c0_117 = arith.constant 0 : index
    %c0_118 = arith.constant 0 : index
    %365 = vector.load %arg4[%364, %c0_117, %c0_118] : memref<4x8x384xf32, #tpu.memory_space<vmem>>, vector<1x8x384xf32>
    %366 = vector.shape_cast %365 : vector<1x8x384xf32> to vector<8x384xf32>
    %cst_119 = arith.constant dense<0.000000e+00> : vector<8x384xf32>
    %367 = tpu.matmul %363, %6, %cst_119 {dimension_numbers = #tpu.dot_dimension_numbers<[1], [0], [0], [1], [0, 0, 1, 1], [], []>} : vector<8x128xf32>, vector<128x384xf32>, vector<8x384xf32> -> vector<8x384xf32>
    %368 = vector.broadcast %7 : vector<1x384xf32> to vector<8x384xf32>
    %369 = arith.addf %367, %368 : vector<8x384xf32>
    %370 = vector.extract_strided_slice %366 {offsets = [0, 0], sizes = [8, 128], strides = [1, 1]} : vector<8x384xf32> to vector<8x128xf32>
    %371 = vector.extract_strided_slice %369 {offsets = [0, 0], sizes = [8, 128], strides = [1, 1]} : vector<8x384xf32> to vector<8x128xf32>
    %372 = arith.addf %370, %371 : vector<8x128xf32>
    %373 = arith.negf %372 : vector<8x128xf32>
    %374 = math.exp %373 : vector<8x128xf32>
    %cst_120 = arith.constant 1.000000e+00 : f32
    %375 = vector.broadcast %cst_120 : f32 to vector<8x128xf32>
    %376 = arith.addf %375, %374 : vector<8x128xf32>
    %377 = arith.divf %375, %376 : vector<8x128xf32>
    %378 = vector.extract_strided_slice %366 {offsets = [0, 128], sizes = [8, 128], strides = [1, 1]} : vector<8x384xf32> to vector<8x128xf32>
    %379 = vector.extract_strided_slice %369 {offsets = [0, 128], sizes = [8, 128], strides = [1, 1]} : vector<8x384xf32> to vector<8x128xf32>
    %380 = arith.addf %378, %379 : vector<8x128xf32>
    %381 = arith.negf %380 : vector<8x128xf32>
    %382 = math.exp %381 : vector<8x128xf32>
    %cst_121 = arith.constant 1.000000e+00 : f32
    %383 = vector.broadcast %cst_121 : f32 to vector<8x128xf32>
    %384 = arith.addf %383, %382 : vector<8x128xf32>
    %385 = arith.divf %383, %384 : vector<8x128xf32>
    %386 = vector.extract_strided_slice %366 {offsets = [0, 256], sizes = [8, 128], strides = [1, 1]} : vector<8x384xf32> to vector<8x128xf32>
    %387 = vector.extract_strided_slice %369 {offsets = [0, 256], sizes = [8, 128], strides = [1, 1]} : vector<8x384xf32> to vector<8x128xf32>
    %388 = arith.mulf %377, %387 : vector<8x128xf32>
    %389 = arith.addf %386, %388 : vector<8x128xf32>
    %390 = math.tanh %389 : vector<8x128xf32>
    %cst_122 = arith.constant 1.000000e+00 : f32
    %391 = vector.broadcast %cst_122 : f32 to vector<8x128xf32>
    %392 = arith.subf %391, %385 : vector<8x128xf32>
    %393 = arith.mulf %392, %390 : vector<8x128xf32>
    %394 = arith.mulf %385, %363 : vector<8x128xf32>
    %395 = arith.addf %393, %394 : vector<8x128xf32>
    %396 = vector.shape_cast %362 : vector<8x1xi1> to vector<8x1xi1>
    %397 = vector.broadcast %396 : vector<8x1xi1> to vector<8x128xi1>
    %398 = arith.select %397, %395, %363 : vector<8x128xi1>, vector<8x128xf32>
    %c0_123 = arith.constant 0 : index
    %c0_124 = arith.constant 0 : index
    %399 = vector.load %arg16[%c0_123, %c0_124] : memref<8x128xf32, #tpu.memory_space<vmem>>, vector<8x128xf32>
    tpu.vector_store %arg16[%c0_123, %c0_124], %398 {strides = array<i32>} : memref<8x128xf32, #tpu.memory_space<vmem>>, vector<8x128xf32>,
    %cst_125 = arith.constant 0.000000e+00 : f32
    %400 = vector.shape_cast %362 : vector<8x1xi1> to vector<8x1xi1>
    %401 = vector.broadcast %400 : vector<8x1xi1> to vector<8x128xi1>
    %402 = vector.broadcast %cst_125 : f32 to vector<8x128xf32>
    %403 = arith.select %401, %398, %402 : vector<8x128xi1>, vector<8x128xf32>
    %404 = arith.index_cast %357 : i32 to index
    %c0_126 = arith.constant 0 : index
    %c0_127 = arith.constant 0 : index
    %405 = vector.load %arg12[%404, %c0_126, %c0_127] : memref<4x8x128xf32, #tpu.memory_space<vmem>>, vector<1x8x128xf32>
    %406 = vector.shape_cast %405 : vector<1x8x128xf32> to vector<8x128xf32>
    %407 = vector.shape_cast %403 : vector<8x128xf32> to vector<1x8x128xf32>
    tpu.vector_store %arg12[%404, %c0_126, %c0_127], %407 {strides = array<i32>} : memref<4x8x128xf32, #tpu.memory_space<vmem>>, vector<1x8x128xf32>,
    %c4_i32_128 = arith.constant 4 : i32
    %c2_i32_129 = arith.constant 2 : i32
    %408 = arith.cmpi eq, %arg1, %c2_i32_129 : i32
    %409 = arith.extui %408 : i1 to i32
    %c0_i32_130 = arith.constant 0 : i32
    %410 = arith.cmpi ne, %409, %c0_i32_130 : i32
    scf.if %410 {
      %c0_131 = arith.constant 0 : index
      %c0_132 = arith.constant 0 : index
      %411 = vector.load %arg15[%c0_131, %c0_132] : memref<8x128xf32, #tpu.memory_space<vmem>>, vector<8x128xf32>
      %c0_133 = arith.constant 0 : index
      %c0_134 = arith.constant 0 : index
      %412 = vector.load %arg13[%c0_133, %c0_134] : memref<8x128xf32, #tpu.memory_space<vmem>>, vector<8x128xf32>
      tpu.vector_store %arg13[%c0_133, %c0_134], %411 {strides = array<i32>} : memref<8x128xf32, #tpu.memory_space<vmem>>, vector<8x128xf32>,
      %c0_135 = arith.constant 0 : index
      %c0_136 = arith.constant 0 : index
      %413 = vector.load %arg16[%c0_135, %c0_136] : memref<8x128xf32, #tpu.memory_space<vmem>>, vector<8x128xf32>
      %c0_137 = arith.constant 0 : index
      %c0_138 = arith.constant 0 : index
      %414 = vector.load %arg14[%c0_137, %c0_138] : memref<8x128xf32, #tpu.memory_space<vmem>>, vector<8x128xf32>
      tpu.vector_store %arg14[%c0_137, %c0_138], %413 {strides = array<i32>} : memref<8x128xf32, #tpu.memory_space<vmem>>, vector<8x128xf32>,
    } else {
    }
    return
  }
  func.func @transform_0(%arg0: i32, %arg1: i32) -> (i32, i32) {
    %c0_i32 = arith.constant 0 : i32
    %c0_i32_0 = arith.constant 0 : i32
    return %arg0, %c0_i32 : i32, i32
  }
  func.func @transform_1(%arg0: i32, %arg1: i32) -> (i32, i32, i32) {
    %c0_i32 = arith.constant 0 : i32
    %c0_i32_0 = arith.constant 0 : i32
    return %arg1, %arg0, %c0_i32 : i32, i32, i32
  }
  func.func @transform_2(%arg0: i32, %arg1: i32) -> (i32, i32, i32) {
    %c2_i32 = arith.constant 2 : i32
    %0 = arith.subi %c2_i32, %arg1 : i32
    %c0_i32 = arith.constant 0 : i32
    %c0_i32_0 = arith.constant 0 : i32
    return %0, %arg0, %c0_i32 : i32, i32, i32
  }
  func.func @transform_3(%arg0: i32, %arg1: i32) -> (i32, i32) {
    %c0_i32 = arith.constant 0 : i32
    %c0_i32_0 = arith.constant 0 : i32
    return %arg0, %c0_i32 : i32, i32
  }
  func.func @transform_4(%arg0: i32, %arg1: i32) -> (i32, i32) {
    %c0_i32 = arith.constant 0 : i32
    %c0_i32_0 = arith.constant 0 : i32
    return %arg0, %c0_i32 : i32, i32
  }
  func.func @transform_5(%arg0: i32, %arg1: i32) -> (i32, i32) {
    %c0_i32 = arith.constant 0 : i32
    %c0_i32_0 = arith.constant 0 : i32
    %c0_i32_1 = arith.constant 0 : i32
    return %c0_i32, %c0_i32_0 : i32, i32
  }
  func.func @transform_6(%arg0: i32, %arg1: i32) -> (i32, i32) {
    %c0_i32 = arith.constant 0 : i32
    %c0_i32_0 = arith.constant 0 : i32
    %c0_i32_1 = arith.constant 0 : i32
    return %c0_i32, %c0_i32_0 : i32, i32
  }
  func.func @transform_7(%arg0: i32, %arg1: i32) -> (i32, i32) {
    %c0_i32 = arith.constant 0 : i32
    %c0_i32_0 = arith.constant 0 : i32
    %c0_i32_1 = arith.constant 0 : i32
    return %c0_i32, %c0_i32_0 : i32, i32
  }
  func.func @transform_8(%arg0: i32, %arg1: i32) -> (i32, i32) {
    %c0_i32 = arith.constant 0 : i32
    %c0_i32_0 = arith.constant 0 : i32
    %c0_i32_1 = arith.constant 0 : i32
    return %c0_i32, %c0_i32_0 : i32, i32
  }
  func.func @transform_9(%arg0: i32, %arg1: i32) -> (i32, i32, i32) {
    %c0_i32 = arith.constant 0 : i32
    %c0_i32_0 = arith.constant 0 : i32
    return %arg1, %arg0, %c0_i32 : i32, i32, i32
  }
  func.func @transform_10(%arg0: i32, %arg1: i32) -> (i32, i32, i32) {
    %c2_i32 = arith.constant 2 : i32
    %0 = arith.subi %c2_i32, %arg1 : i32
    %c0_i32 = arith.constant 0 : i32
    %c0_i32_0 = arith.constant 0 : i32
    return %0, %arg0, %c0_i32 : i32, i32, i32
  }
  func.func @transform_11(%arg0: i32, %arg1: i32) -> (i32, i32) {
    %c0_i32 = arith.constant 0 : i32
    %c0_i32_0 = arith.constant 0 : i32
    return %arg0, %c0_i32 : i32, i32
  }
  func.func @transform_12(%arg0: i32, %arg1: i32) -> (i32, i32) {
    %c0_i32 = arith.constant 0 : i32
    %c0_i32_0 = arith.constant 0 : i32
    return %arg0, %c0_i32 : i32, i32
  }
}

</mosaic_0001>

<llo_original>
// kernel: encoder_rnn_forward.1
$region0: #{encoder_rnn_forward.1}
  #allocation0 [shape = 'u32[]', space=smem, size = 0x4, offset = 0x4, fixed_abs, tag = 'smem constant byte address 0x4 - core index']
  #allocation1 [shape = 'u32[72,128]{1,0:T(1,128)}', space=vmem, size = 0x9000, scoped, tag = 'internal scratch']
  #allocation2 [shape = 'f32[8,128]{1,0:T(8,128)}', space=vmem, size = 0x1000, scoped, tag = 'scratch operand']
  #allocation3 [shape = 'f32[8,128]{1,0:T(8,128)}', space=vmem, size = 0x1000, scoped, tag = 'scratch operand']
  %s0 = inlined_call_operand.vmem [shape: s32[8,1], index: 0, kind: input, shape index: {}]
  %s1 = inlined_call_operand.vmem [shape: f32[12,8,384], index: 1, kind: input, shape index: {}]
  %s2 = inlined_call_operand.vmem [shape: f32[12,8,384], index: 2, kind: input, shape index: {}]
  %s3 = inlined_call_operand.vmem [shape: f32[8,128], index: 3, kind: input, shape index: {}, may-alias: {3,4}]
  %s4 = inlined_call_operand.vmem [shape: f32[8,128], index: 4, kind: input, shape index: {}, may-alias: {3,4}]
  %s5 = inlined_call_operand.vmem [shape: f32[128,384], index: 5, kind: input, shape index: {}]
  %s6 = inlined_call_operand.vmem [shape: f32[1,384], index: 6, kind: input, shape index: {}]
  %s7 = inlined_call_operand.vmem [shape: f32[128,384], index: 7, kind: input, shape index: {}]
  %s8 = inlined_call_operand.vmem [shape: f32[1,384], index: 8, kind: input, shape index: {}]
  %s9 = inlined_call_operand.vmem [shape: f32[12,8,128], index: 9, kind: output, shape index: {0}]
  %s10 = inlined_call_operand.vmem [shape: f32[12,8,128], index: 10, kind: output, shape index: {1}]
  %s11 = inlined_call_operand.vmem [shape: f32[8,128], index: 11, kind: output, shape index: {2}]
  %s12 = inlined_call_operand.vmem [shape: f32[8,128], index: 12, kind: output, shape index: {3}]
  %13 = xla_tuple %s9, %s10, %s11, %s12
  %s14 = sld [smem:[#allocation0]]
  $region101: #{encoder_rnn_forward.1} parent=0
    _
  %s16 = ssub.s32 1, %s14
  %s17 = scalar_select 0, %s16, %s14
  loop: start=0, step=1, limit=5
  $region2: #{encoder_rnn_forward.1} parent=0 // loop_pre_header
    _
  $region3: #{encoder_rnn_forward.1} parent=0 // loop_header
    %s19 = sphi 0, %s23
    %p20 = scmp.ge.s32.totalorder %s19, 5
    %s26 = sphi 0, %s38
    %s27 = sphi 0, %s34
    %s28 = sphi 0, %s26
    %s29 = sphi 0, %s27
    %s30 = sphi 0, %s28
    %s31 = sphi 0, %s29
    %s41 = sphi 0, %s43
    %s44 = sphi 0, %s41
    %s45 = sphi 0, %s44
    %s61 = sphi 0, %s45
    %s69 = sphi 0, %s71
    %s72 = sphi 0, %s69
    %s73 = sphi 0, %s72
    %s89 = sphi 0, %s73
    %s99 = sphi 0, %s101
    %s102 = sphi 0, %s99
    %s103 = sphi 0, %s102
    %s119 = sphi 0, %s103
    %s125 = sphi 0, %s127
    %s128 = sphi 0, %s125
    %s129 = sphi 0, %s128
    %s145 = sphi 0, %s129
    %s151 = sphi 0, %s153
    %s154 = sphi 0, %s151
    %s155 = sphi 0, %s154
    %s171 = sphi 0, %s155
    %s175 = sphi 0, %s175
    %s177 = sphi 0, %s175
    %s178 = sphi 0, %s177
    %s192 = sphi 0, %s178
    %s196 = sphi 0, %s196
    %s198 = sphi 0, %s196
    %s199 = sphi 0, %s198
    %s213 = sphi 0, %s199
    %s217 = sphi 0, %s217
    %s219 = sphi 0, %s217
    %s220 = sphi 0, %s219
    %s234 = sphi 0, %s220
    %s238 = sphi 0, %s238
    %s240 = sphi 0, %s238
    %s241 = sphi 0, %s240
    %s255 = sphi 0, %s241
    %s263 = sphi 0, %s265
    %s266 = sphi 0, %s263
    %s267 = sphi 0, %s266
    %s283 = sphi 0, %s267
    %s293 = sphi 0, %s295
    %s296 = sphi 0, %s293
    %s297 = sphi 0, %s296
    %s313 = sphi 0, %s297
    %s319 = sphi 0, %s321
    %s322 = sphi 0, %s319
    %s323 = sphi 0, %s322
    %s339 = sphi 0, %s323
    %s345 = sphi 0, %s347
    %s348 = sphi 0, %s345
    %s349 = sphi 0, %s348
    %s365 = sphi 0, %s349
  $region4: #{encoder_rnn_forward.1} parent=0 // loop_header_branch
    %22 = sbr.rel (%p20) target = $region8
  $region5: #{encoder_rnn_forward.1} parent=0 // loop_body
    %s24 = ssub.s32 %s19, 1
    %s25 = ssub.s32 %s19, 2
    %s32 = sadd.s32 1, %s27
    %p33 = scmp.ge.s32.totalorder %s32, 3
    %s34 = scalar_select %p33, 0, %s32
    %s35 = sadd.s32 1, %s26
    %s36 = scalar_select %p33, %s35, %s26
    %p37 = scmp.ge.s32.totalorder %s36, 1
    %s38 = scalar_select %p37, 0, %s36
    %s39 = ssub.s32 %s26, %s38
    %p40 = scmp.eq.s32.totalorder %s39, 0
    %s42 = sadd.s32 %s41, 1
    %s43 = scalar_select %p40, %s41, %s42
    %p46 = pneg %p40
    %p47 = scmp.eq.s32.totalorder %s19, 2
    %p48 = por %p46, %p47
    %p49 = scmp.ne.s32.totalorder %s41, %s44
    %p50 = scmp.eq.s32.totalorder %s19, 0
    %p51 = por %p49, %p50
    %p52 = scmp.ne.s32.totalorder %s41, %s44
    %p53 = scmp.eq.s32.totalorder %s24, 2
    %p54 = por %p52, %p53
    %p55 = scmp.ne.s32.totalorder %s44, %s45
    %p56 = scmp.eq.s32.totalorder %s24, 0
    %p57 = por %p55, %p56
    %p58 = scmp.ne.s32.totalorder %s44, %s45
    %p59 = scmp.eq.s32.totalorder %s25, 2
    %p60 = por %p58, %p59
    %p62 = scmp.ne.s32.totalorder %s45, %s61
    %p63 = scmp.eq.s32.totalorder %s25, 0
    %p64 = por %p62, %p63
    %s65 = ssub.s32 %s27, %s34
    %s66 = ssub.s32 %s26, %s38
    %s67 = sor.u32 %s65, %s66
    %p68 = scmp.eq.s32.totalorder %s67, 0
    %s70 = sadd.s32 %s69, 1
    %s71 = scalar_select %p68, %s69, %s70
    %p74 = pneg %p68
    %p75 = scmp.eq.s32.totalorder %s19, 2
    %p76 = por %p74, %p75
    %p77 = scmp.ne.s32.totalorder %s69, %s72
    %p78 = scmp.eq.s32.totalorder %s19, 0
    %p79 = por %p77, %p78
    %p80 = scmp.ne.s32.totalorder %s69, %s72
    %p81 = scmp.eq.s32.totalorder %s24, 2
    %p82 = por %p80, %p81
    %p83 = scmp.ne.s32.totalorder %s72, %s73
    %p84 = scmp.eq.s32.totalorder %s24, 0
    %p85 = por %p83, %p84
    %p86 = scmp.ne.s32.totalorder %s72, %s73
    %p87 = scmp.eq.s32.totalorder %s25, 2
    %p88 = por %p86, %p87
    %p90 = scmp.ne.s32.totalorder %s73, %s89
    %p91 = scmp.eq.s32.totalorder %s25, 0
    %p92 = por %p90, %p91
    %s93 = ssub.s32 2, %s27
    %s94 = ssub.s32 2, %s34
    %s95 = ssub.s32 %s93, %s94
    %s96 = ssub.s32 %s26, %s38
    %s97 = sor.u32 %s95, %s96
    %p98 = scmp.eq.s32.totalorder %s97, 0
    %s100 = sadd.s32 %s99, 1
    %s101 = scalar_select %p98, %s99, %s100
    %p104 = pneg %p98
    %p105 = scmp.eq.s32.totalorder %s19, 2
    %p106 = por %p104, %p105
    %p107 = scmp.ne.s32.totalorder %s99, %s102
    %p108 = scmp.eq.s32.totalorder %s19, 0
    %p109 = por %p107, %p108
    %p110 = scmp.ne.s32.totalorder %s99, %s102
    %p111 = scmp.eq.s32.totalorder %s24, 2
    %p112 = por %p110, %p111
    %p113 = scmp.ne.s32.totalorder %s102, %s103
    %p114 = scmp.eq.s32.totalorder %s24, 0
    %p115 = por %p113, %p114
    %p116 = scmp.ne.s32.totalorder %s102, %s103
    %p117 = scmp.eq.s32.totalorder %s25, 2
    %p118 = por %p116, %p117
    %p120 = scmp.ne.s32.totalorder %s103, %s119
    %p121 = scmp.eq.s32.totalorder %s25, 0
    %p122 = por %p120, %p121
    %s123 = ssub.s32 %s26, %s38
    %p124 = scmp.eq.s32.totalorder %s123, 0
    %s126 = sadd.s32 %s125, 1
    %s127 = scalar_select %p124, %s125, %s126
    %p130 = pneg %p124
    %p131 = scmp.eq.s32.totalorder %s19, 2
    %p132 = por %p130, %p131
    %p133 = scmp.ne.s32.totalorder %s125, %s128
    %p134 = scmp.eq.s32.totalorder %s19, 0
    %p135 = por %p133, %p134
    %p136 = scmp.ne.s32.totalorder %s125, %s128
    %p137 = scmp.eq.s32.totalorder %s24, 2
    %p138 = por %p136, %p137
    %p139 = scmp.ne.s32.totalorder %s128, %s129
    %p140 = scmp.eq.s32.totalorder %s24, 0
    %p141 = por %p139, %p140
    %p142 = scmp.ne.s32.totalorder %s128, %s129
    %p143 = scmp.eq.s32.totalorder %s25, 2
    %p144 = por %p142, %p143
    %p146 = scmp.ne.s32.totalorder %s129, %s145
    %p147 = scmp.eq.s32.totalorder %s25, 0
    %p148 = por %p146, %p147
    %s149 = ssub.s32 %s26, %s38
    %p150 = scmp.eq.s32.totalorder %s149, 0
    %s152 = sadd.s32 %s151, 1
    %s153 = scalar_select %p150, %s151, %s152
    %p156 = pneg %p150
    %p157 = scmp.eq.s32.totalorder %s19, 2
    %p158 = por %p156, %p157
    %p159 = scmp.ne.s32.totalorder %s151, %s154
    %p160 = scmp.eq.s32.totalorder %s19, 0
    %p161 = por %p159, %p160
    %p162 = scmp.ne.s32.totalorder %s151, %s154
    %p163 = scmp.eq.s32.totalorder %s24, 2
    %p164 = por %p162, %p163
    %p165 = scmp.ne.s32.totalorder %s154, %s155
    %p166 = scmp.eq.s32.totalorder %s24, 0
    %p167 = por %p165, %p166
    %p168 = scmp.ne.s32.totalorder %s154, %s155
    %p169 = scmp.eq.s32.totalorder %s25, 2
    %p170 = por %p168, %p169
    %p172 = scmp.ne.s32.totalorder %s155, %s171
    %p173 = scmp.eq.s32.totalorder %s25, 0
    %p174 = por %p172, %p173
    %s176 = sadd.s32 %s175, 1
    %p179 = scmp.eq.s32.totalorder %s19, 2
    %p180 = scmp.ne.s32.totalorder %s175, %s177
    %p181 = scmp.eq.s32.totalorder %s19, 0
    %p182 = por %p180, %p181
    %p183 = scmp.ne.s32.totalorder %s175, %s177
    %p184 = scmp.eq.s32.totalorder %s24, 2
    %p185 = por %p183, %p184
    %p186 = scmp.ne.s32.totalorder %s177, %s178
    %p187 = scmp.eq.s32.totalorder %s24, 0
    %p188 = por %p186, %p187
    %p189 = scmp.ne.s32.totalorder %s177, %s178
    %p190 = scmp.eq.s32.totalorder %s25, 2
    %p191 = por %p189, %p190
    %p193 = scmp.ne.s32.totalorder %s178, %s192
    %p194 = scmp.eq.s32.totalorder %s25, 0
    %p195 = por %p193, %p194
    %s197 = sadd.s32 %s196, 1
    %p200 = scmp.eq.s32.totalorder %s19, 2
    %p201 = scmp.ne.s32.totalorder %s196, %s198
    %p202 = scmp.eq.s32.totalorder %s19, 0
    %p203 = por %p201, %p202
    %p204 = scmp.ne.s32.totalorder %s196, %s198
    %p205 = scmp.eq.s32.totalorder %s24, 2
    %p206 = por %p204, %p205
    %p207 = scmp.ne.s32.totalorder %s198, %s199
    %p208 = scmp.eq.s32.totalorder %s24, 0
    %p209 = por %p207, %p208
    %p210 = scmp.ne.s32.totalorder %s198, %s199
    %p211 = scmp.eq.s32.totalorder %s25, 2
    %p212 = por %p210, %p211
    %p214 = scmp.ne.s32.totalorder %s199, %s213
    %p215 = scmp.eq.s32.totalorder %s25, 0
    %p216 = por %p214, %p215
    %s218 = sadd.s32 %s217, 1
    %p221 = scmp.eq.s32.totalorder %s19, 2
    %p222 = scmp.ne.s32.totalorder %s217, %s219
    %p223 = scmp.eq.s32.totalorder %s19, 0
    %p224 = por %p222, %p223
    %p225 = scmp.ne.s32.totalorder %s217, %s219
    %p226 = scmp.eq.s32.totalorder %s24, 2
    %p227 = por %p225, %p226
    %p228 = scmp.ne.s32.totalorder %s219, %s220
    %p229 = scmp.eq.s32.totalorder %s24, 0
    %p230 = por %p228, %p229
    %p231 = scmp.ne.s32.totalorder %s219, %s220
    %p232 = scmp.eq.s32.totalorder %s25, 2
    %p233 = por %p231, %p232
    %p235 = scmp.ne.s32.totalorder %s220, %s234
    %p236 = scmp.eq.s32.totalorder %s25, 0
    %p237 = por %p235, %p236
    %s239 = sadd.s32 %s238, 1
    %p242 = scmp.eq.s32.totalorder %s19, 2
    %p243 = scmp.ne.s32.totalorder %s238, %s240
    %p244 = scmp.eq.s32.totalorder %s19, 0
    %p245 = por %p243, %p244
    %p246 = scmp.ne.s32.totalorder %s238, %s240
    %p247 = scmp.eq.s32.totalorder %s24, 2
    %p248 = por %p246, %p247
    %p249 = scmp.ne.s32.totalorder %s240, %s241
    %p250 = scmp.eq.s32.totalorder %s24, 0
    %p251 = por %p249, %p250
    %p252 = scmp.ne.s32.totalorder %s240, %s241
    %p253 = scmp.eq.s32.totalorder %s25, 2
    %p254 = por %p252, %p253
    %p256 = scmp.ne.s32.totalorder %s241, %s255
    %p257 = scmp.eq.s32.totalorder %s25, 0
    %p258 = por %p256, %p257
    %s259 = ssub.s32 %s27, %s34
    %s260 = ssub.s32 %s26, %s38
    %s261 = sor.u32 %s259, %s260
    %p262 = scmp.eq.s32.totalorder %s261, 0
    %s264 = sadd.s32 %s263, 1
    %s265 = scalar_select %p262, %s263, %s264
    %p268 = pneg %p262
    %p269 = scmp.eq.s32.totalorder %s19, 2
    %p270 = por %p268, %p269
    %p271 = scmp.ne.s32.totalorder %s263, %s266
    %p272 = scmp.eq.s32.totalorder %s19, 0
    %p273 = por %p271, %p272
    %p274 = scmp.ne.s32.totalorder %s263, %s266
    %p275 = scmp.eq.s32.totalorder %s24, 2
    %p276 = por %p274, %p275
    %p277 = scmp.ne.s32.totalorder %s266, %s267
    %p278 = scmp.eq.s32.totalorder %s24, 0
    %p279 = por %p277, %p278
    %p280 = scmp.ne.s32.totalorder %s266, %s267
    %p281 = scmp.eq.s32.totalorder %s25, 2
    %p282 = por %p280, %p281
    %p284 = scmp.ne.s32.totalorder %s267, %s283
    %p285 = scmp.eq.s32.totalorder %s25, 0
    %p286 = por %p284, %p285
    %s287 = ssub.s32 2, %s27
    %s288 = ssub.s32 2, %s34
    %s289 = ssub.s32 %s287, %s288
    %s290 = ssub.s32 %s26, %s38
    %s291 = sor.u32 %s289, %s290
    %p292 = scmp.eq.s32.totalorder %s291, 0
    %s294 = sadd.s32 %s293, 1
    %s295 = scalar_select %p292, %s293, %s294
    %p298 = pneg %p292
    %p299 = scmp.eq.s32.totalorder %s19, 2
    %p300 = por %p298, %p299
    %p301 = scmp.ne.s32.totalorder %s293, %s296
    %p302 = scmp.eq.s32.totalorder %s19, 0
    %p303 = por %p301, %p302
    %p304 = scmp.ne.s32.totalorder %s293, %s296
    %p305 = scmp.eq.s32.totalorder %s24, 2
    %p306 = por %p304, %p305
    %p307 = scmp.ne.s32.totalorder %s296, %s297
    %p308 = scmp.eq.s32.totalorder %s24, 0
    %p309 = por %p307, %p308
    %p310 = scmp.ne.s32.totalorder %s296, %s297
    %p311 = scmp.eq.s32.totalorder %s25, 2
    %p312 = por %p310, %p311
    %p314 = scmp.ne.s32.totalorder %s297, %s313
    %p315 = scmp.eq.s32.totalorder %s25, 0
    %p316 = por %p314, %p315
    %s317 = ssub.s32 %s26, %s38
    %p318 = scmp.eq.s32.totalorder %s317, 0
    %s320 = sadd.s32 %s319, 1
    %s321 = scalar_select %p318, %s319, %s320
    %p324 = pneg %p318
    %p325 = scmp.eq.s32.totalorder %s19, 2
    %p326 = por %p324, %p325
    %p327 = scmp.ne.s32.totalorder %s319, %s322
    %p328 = scmp.eq.s32.totalorder %s19, 0
    %p329 = por %p327, %p328
    %p330 = scmp.ne.s32.totalorder %s319, %s322
    %p331 = scmp.eq.s32.totalorder %s24, 2
    %p332 = por %p330, %p331
    %p333 = scmp.ne.s32.totalorder %s322, %s323
    %p334 = scmp.eq.s32.totalorder %s24, 0
    %p335 = por %p333, %p334
    %p336 = scmp.ne.s32.totalorder %s322, %s323
    %p337 = scmp.eq.s32.totalorder %s25, 2
    %p338 = por %p336, %p337
    %p340 = scmp.ne.s32.totalorder %s323, %s339
    %p341 = scmp.eq.s32.totalorder %s25, 0
    %p342 = por %p340, %p341
    %s343 = ssub.s32 %s26, %s38
    %p344 = scmp.eq.s32.totalorder %s343, 0
    %s346 = sadd.s32 %s345, 1
    %s347 = scalar_select %p344, %s345, %s346
    %p350 = pneg %p344
    %p351 = scmp.eq.s32.totalorder %s19, 2
    %p352 = por %p350, %p351
    %p353 = scmp.ne.s32.totalorder %s345, %s348
    %p354 = scmp.eq.s32.totalorder %s19, 0
    %p355 = por %p353, %p354
    %p356 = scmp.ne.s32.totalorder %s345, %s348
    %p357 = scmp.eq.s32.totalorder %s24, 2
    %p358 = por %p356, %p357
    %p359 = scmp.ne.s32.totalorder %s348, %s349
    %p360 = scmp.eq.s32.totalorder %s24, 0
    %p361 = por %p359, %p360
    %p362 = scmp.ne.s32.totalorder %s348, %s349
    %p363 = scmp.eq.s32.totalorder %s25, 2
    %p364 = por %p362, %p363
    %p366 = scmp.ne.s32.totalorder %s349, %s365
    %p367 = scmp.eq.s32.totalorder %s25, 0
    %p368 = por %p366, %p367
    %p369 = scmp.le.s32.totalorder 1, %s19
    %p370 = scmp.lt.s32.totalorder %s19, 4
    %p371 = pnand %p369, %p370
    %p372 = pneg %p371
    // Predicated region
    $region9: #{encoder_rnn_forward.1} parent=5 // pred_check
      _
    $region10: #{encoder_rnn_forward.1} parent=5 // pred_check_branch
      %374 = sbr.rel (%p371) target = $region12
    $region11: #{encoder_rnn_forward.1} parent=5 // pred_region
      %s375 = ssub.s32 %s19, 1
      // Predicated region
      $region13: #{encoder_rnn_forward.1} parent=11 // pred_check
        %p376 = pneg %p57
      $region14: #{encoder_rnn_forward.1} parent=11 // pred_check_branch
        %378 = sbr.rel (%p376) target = $region16
      $region15: #{encoder_rnn_forward.1} parent=11 // pred_region
        %p379 = scmp.lt.s32.totalorder %s28, 0
        %s380 = scalar_select %p379, %s28, 0
        %s381 = smul.addr %s380, 8
        %s382 = scalar_lea.vmem %s0, %s381
      $region16: #{encoder_rnn_forward.1} parent=11 // pred_fallthru
        _
      // Predicated region
      $region17: #{encoder_rnn_forward.1} parent=11 // pred_check
        %p383 = pneg %p141
      $region18: #{encoder_rnn_forward.1} parent=11 // pred_check_branch
        %385 = sbr.rel (%p383) target = $region20
      $region19: #{encoder_rnn_forward.1} parent=11 // pred_region
        %p386 = scmp.lt.s32.totalorder %s28, 0
        %s387 = scalar_select %p386, %s28, 0
        %s388 = smul.addr %s387, 8
        %s389 = scalar_lea.vmem %s3, %s388
      $region20: #{encoder_rnn_forward.1} parent=11 // pred_fallthru
        _
      // Predicated region
      $region21: #{encoder_rnn_forward.1} parent=11 // pred_check
        %p390 = pneg %p167
      $region22: #{encoder_rnn_forward.1} parent=11 // pred_check_branch
        %392 = sbr.rel (%p390) target = $region24
      $region23: #{encoder_rnn_forward.1} parent=11 // pred_region
        %p393 = scmp.lt.s32.totalorder %s28, 0
        %s394 = scalar_select %p393, %s28, 0
        %s395 = smul.addr %s394, 8
        %s396 = scalar_lea.vmem %s4, %s395
      $region24: #{encoder_rnn_forward.1} parent=11 // pred_fallthru
        _
      // Predicated region
      $region25: #{encoder_rnn_forward.1} parent=11 // pred_check
        %p397 = pneg %p188
      $region26: #{encoder_rnn_forward.1} parent=11 // pred_check_branch
        %399 = sbr.rel (%p397) target = $region28
      $region27: #{encoder_rnn_forward.1} parent=11 // pred_region
        _
      $region28: #{encoder_rnn_forward.1} parent=11 // pred_fallthru
        _
      // Predicated region
      $region29: #{encoder_rnn_forward.1} parent=11 // pred_check
        %p400 = pneg %p209
      $region30: #{encoder_rnn_forward.1} parent=11 // pred_check_branch
        %402 = sbr.rel (%p400) target = $region32
      $region31: #{encoder_rnn_forward.1} parent=11 // pred_region
        _
      $region32: #{encoder_rnn_forward.1} parent=11 // pred_fallthru
        _
      // Predicated region
      $region33: #{encoder_rnn_forward.1} parent=11 // pred_check
        %p403 = pneg %p230
      $region34: #{encoder_rnn_forward.1} parent=11 // pred_check_branch
        %405 = sbr.rel (%p403) target = $region36
      $region35: #{encoder_rnn_forward.1} parent=11 // pred_region
        _
      $region36: #{encoder_rnn_forward.1} parent=11 // pred_fallthru
        _
      // Predicated region
      $region37: #{encoder_rnn_forward.1} parent=11 // pred_check
        %p406 = pneg %p251
      $region38: #{encoder_rnn_forward.1} parent=11 // pred_check_branch
        %408 = sbr.rel (%p406) target = $region40
      $region39: #{encoder_rnn_forward.1} parent=11 // pred_region
        _
      $region40: #{encoder_rnn_forward.1} parent=11 // pred_fallthru
        _
    $region12: #{encoder_rnn_forward.1} parent=5 // pred_fallthru
      _
    %p409 = scmp.lt.s32.totalorder %s19, 3
    // Predicated region
    $region41: #{encoder_rnn_forward.1} parent=5 // pred_check
      %p410 = pneg %p409
    $region42: #{encoder_rnn_forward.1} parent=5 // pred_check_branch
      %412 = sbr.rel (%p410) target = $region44
    $region43: #{encoder_rnn_forward.1} parent=5 // pred_region
      // Predicated region
      $region45: #{encoder_rnn_forward.1} parent=43 // pred_check
        %p413 = pneg %p79
      $region46: #{encoder_rnn_forward.1} parent=43 // pred_check_branch
        %415 = sbr.rel (%p413) target = $region48
      $region47: #{encoder_rnn_forward.1} parent=43 // pred_region
        %s416 = smul.u32 4, %s27
        %p417 = scmp.lt.s32.totalorder %s416, 11
        %s418 = scalar_select %p417, %s416, 11
        %p419 = scmp.lt.s32.totalorder %s26, 0
        %s420 = scalar_select %p419, %s26, 0
        %s421 = smul.addr %s420, 3
        %s422 = smul.addr %s418, 3
        %s423 = sadd.s32 %s421, %s422
        %s424 = smul.addr %s423, 8
        %s425 = scalar_lea.vmem %s1, %s424
        %s426 = smul.u32 4, %s27
      $region48: #{encoder_rnn_forward.1} parent=43 // pred_fallthru
        _
      // Predicated region
      $region49: #{encoder_rnn_forward.1} parent=43 // pred_check
        %p427 = pneg %p109
      $region50: #{encoder_rnn_forward.1} parent=43 // pred_check_branch
        %429 = sbr.rel (%p427) target = $region52
      $region51: #{encoder_rnn_forward.1} parent=43 // pred_region
        %s430 = ssub.s32 2, %s27
        %s431 = smul.u32 4, %s430
        %p432 = scmp.lt.s32.totalorder %s431, 11
        %s433 = scalar_select %p432, %s431, 11
        %p434 = scmp.lt.s32.totalorder %s26, 0
        %s435 = scalar_select %p434, %s26, 0
        %s436 = smul.addr %s435, 3
        %s437 = smul.addr %s433, 3
        %s438 = sadd.s32 %s436, %s437
        %s439 = smul.addr %s438, 8
        %s440 = scalar_lea.vmem %s2, %s439
        %s441 = ssub.s32 2, %s27
        %s442 = smul.u32 4, %s441
      $region52: #{encoder_rnn_forward.1} parent=43 // pred_fallthru
        _
    $region44: #{encoder_rnn_forward.1} parent=5 // pred_fallthru
      _
    %p443 = scmp.le.s32.totalorder 1, %s19
    %p444 = scmp.lt.s32.totalorder %s19, 4
    %p445 = pnand %p443, %p444
    %p446 = pneg %p445
    // Predicated region
    $region53: #{encoder_rnn_forward.1} parent=5 // pred_check
      _
    $region54: #{encoder_rnn_forward.1} parent=5 // pred_check_branch
      %448 = sbr.rel (%p445) target = $region56
    $region55: #{encoder_rnn_forward.1} parent=5 // pred_region
      %s449 = ssub.s32 %s19, 1
      %p450 = scmp.lt.s32.totalorder %s28, 0
      %s451 = scalar_select %p450, %s28, 0
      %s452 = smul.addr %s451, 8
      %s453 = scalar_lea.vmem %s0, %s452
      %p454 = pneg %p57
      %p455 = pneg %p54
      %s456 = smul.u32 4, %s29
      %p457 = scmp.lt.s32.totalorder %s456, 11
      %s458 = scalar_select %p457, %s456, 11
      %p459 = scmp.lt.s32.totalorder %s28, 0
      %s460 = scalar_select %p459, %s28, 0
      %s461 = smul.addr %s460, 3
      %s462 = smul.addr %s458, 3
      %s463 = sadd.s32 %s461, %s462
      %s464 = smul.addr %s463, 8
      %s465 = scalar_lea.vmem %s1, %s464
      %p466 = pneg %p85
      %p467 = pneg %p82
      %s468 = ssub.s32 2, %s29
      %s469 = smul.u32 4, %s468
      %p470 = scmp.lt.s32.totalorder %s469, 11
      %s471 = scalar_select %p470, %s469, 11
      %p472 = scmp.lt.s32.totalorder %s28, 0
      %s473 = scalar_select %p472, %s28, 0
      %s474 = smul.addr %s473, 3
      %s475 = smul.addr %s471, 3
      %s476 = sadd.s32 %s474, %s475
      %s477 = smul.addr %s476, 8
      %s478 = scalar_lea.vmem %s2, %s477
      %p479 = pneg %p115
      %p480 = pneg %p112
      %p481 = scmp.lt.s32.totalorder %s28, 0
      %s482 = scalar_select %p481, %s28, 0
      %s483 = smul.addr %s482, 8
      %s484 = scalar_lea.vmem %s3, %s483
      %p485 = pneg %p141
      %p486 = pneg %p138
      %p487 = scmp.lt.s32.totalorder %s28, 0
      %s488 = scalar_select %p487, %s28, 0
      %s489 = smul.addr %s488, 8
      %s490 = scalar_lea.vmem %s4, %s489
      %p491 = pneg %p167
      %p492 = pneg %p164
      %p493 = pneg %p188
      %p494 = pneg %p185
      %p495 = pneg %p209
      %p496 = pneg %p206
      %p497 = pneg %p230
      %p498 = pneg %p227
      %p499 = pneg %p251
      %p500 = pneg %p248
      %p501 = pneg %p279
      %p502 = pneg %p276
      %s503 = smul.u32 4, %s29
      %p504 = scmp.lt.s32.totalorder %s503, 11
      %s505 = scalar_select %p504, %s503, 11
      %p506 = scmp.lt.s32.totalorder %s28, 0
      %s507 = scalar_select %p506, %s28, 0
      %s508 = sadd.s32 %s507, %s505
      %s509 = smul.addr %s508, 8
      %s510 = scalar_lea.vmem %s9, %s509
      %p511 = pneg %p309
      %p512 = pneg %p306
      %s513 = ssub.s32 2, %s29
      %s514 = smul.u32 4, %s513
      %p515 = scmp.lt.s32.totalorder %s514, 11
      %s516 = scalar_select %p515, %s514, 11
      %p517 = scmp.lt.s32.totalorder %s28, 0
      %s518 = scalar_select %p517, %s28, 0
      %s519 = sadd.s32 %s518, %s516
      %s520 = smul.addr %s519, 8
      %s521 = scalar_lea.vmem %s10, %s520
      %p522 = pneg %p335
      %p523 = pneg %p332
      %p524 = scmp.lt.s32.totalorder %s28, 0
      %s525 = scalar_select %p524, %s28, 0
      %s526 = smul.addr %s525, 8
      %s527 = scalar_lea.vmem %s11, %s526
      %p528 = pneg %p361
      %p529 = pneg %p358
      %p530 = scmp.lt.s32.totalorder %s28, 0
      %s531 = scalar_select %p530, %s28, 0
      %s532 = smul.addr %s531, 8
      %s533 = scalar_lea.vmem %s12, %s532
      %p534 = scmp.lt.s32.totalorder %s28, 0
      %s535 = scalar_select %p534, %s28, 0
      %s536 = smul.addr %s535, 8
      %s537 = scalar_lea.vmem %s0, %s536
      %s538 = smul.u32 4, %s29
      %p539 = scmp.lt.s32.totalorder %s538, 11
      %s540 = scalar_select %p539, %s538, 11
      %p541 = scmp.lt.s32.totalorder %s28, 0
      %s542 = scalar_select %p541, %s28, 0
      %s543 = smul.addr %s542, 3
      %s544 = smul.addr %s540, 3
      %s545 = sadd.s32 %s543, %s544
      %s546 = smul.addr %s545, 8
      %s547 = scalar_lea.vmem %s1, %s546
      %s548 = smul.u32 4, %s29
      %s549 = ssub.s32 2, %s29
      %s550 = smul.u32 4, %s549
      %p551 = scmp.lt.s32.totalorder %s550, 11
      %s552 = scalar_select %p551, %s550, 11
      %p553 = scmp.lt.s32.totalorder %s28, 0
      %s554 = scalar_select %p553, %s28, 0
      %s555 = smul.addr %s554, 3
      %s556 = smul.addr %s552, 3
      %s557 = sadd.s32 %s555, %s556
      %s558 = smul.addr %s557, 8
      %s559 = scalar_lea.vmem %s2, %s558
      %s560 = ssub.s32 2, %s29
      %s561 = smul.u32 4, %s560
      %p562 = scmp.lt.s32.totalorder %s28, 0
      %s563 = scalar_select %p562, %s28, 0
      %s564 = smul.addr %s563, 8
      %s565 = scalar_lea.vmem %s3, %s564
      %p566 = scmp.lt.s32.totalorder %s28, 0
      %s567 = scalar_select %p566, %s28, 0
      %s568 = smul.addr %s567, 8
      %s569 = scalar_lea.vmem %s4, %s568
      %s570 = smul.u32 4, %s29
      %p571 = scmp.lt.s32.totalorder %s570, 11
      %s572 = scalar_select %p571, %s570, 11
      %p573 = scmp.lt.s32.totalorder %s28, 0
      %s574 = scalar_select %p573, %s28, 0
      %s575 = sadd.s32 %s574, %s572
      %s576 = smul.addr %s575, 8
      %s577 = scalar_lea.vmem %s9, %s576
      %s578 = smul.u32 4, %s29
      %s579 = ssub.s32 2, %s29
      %s580 = smul.u32 4, %s579
      %p581 = scmp.lt.s32.totalorder %s580, 11
      %s582 = scalar_select %p581, %s580, 11
      %p583 = scmp.lt.s32.totalorder %s28, 0
      %s584 = scalar_select %p583, %s28, 0
      %s585 = sadd.s32 %s584, %s582
      %s586 = smul.addr %s585, 8
      %s587 = scalar_lea.vmem %s10, %s586
      %s588 = ssub.s32 2, %s29
      %s589 = smul.u32 4, %s588
      %p590 = scmp.lt.s32.totalorder %s28, 0
      %s591 = scalar_select %p590, %s28, 0
      %s592 = smul.addr %s591, 8
      %s593 = scalar_lea.vmem %s11, %s592
      %p594 = scmp.lt.s32.totalorder %s28, 0
      %s595 = scalar_select %p594, %s28, 0
      %s596 = smul.addr %s595, 8
      %s597 = scalar_lea.vmem %s12, %s596
      %p598 = scmp.eq.s32.totalorder %s29, 0
      // Predicated region
      $region57: #{encoder_rnn_forward.1} parent=55 // pred_check
        %p599 = pneg %p598
      $region58: #{encoder_rnn_forward.1} parent=55 // pred_check_branch
        %601 = sbr.rel (%p599) target = $region60
      $region59: #{encoder_rnn_forward.1} parent=55 // pred_region
        %v602 = vld [vmem:[%s565] sm:$0xff]
        %603 = vst [vmem:[#allocation2] sm:$0xff] %v602
        %v604 = vld [vmem:[%s569] sm:$0xff]
        %605 = vst [vmem:[#allocation3] sm:$0xff] %v604
      $region60: #{encoder_rnn_forward.1} parent=55 // pred_fallthru
        _
      %v606 = vld [vmem:[%s537] sm:$0xff]
      %v607 = vld [vmem:[%s5] sm:$0xff]
      %v608 = vld [vmem:[%s5 + $0x8] sm:$0xff]
      %v609 = vld [vmem:[%s5 + $0x10] sm:$0xff]
      %v610 = vld [vmem:[%s5 + $0x18] sm:$0xff]
      %v611 = vld [vmem:[%s5 + $0x20] sm:$0xff]
      %v612 = vld [vmem:[%s5 + $0x28] sm:$0xff]
      %v613 = vld [vmem:[%s5 + $0x30] sm:$0xff]
      %v614 = vld [vmem:[%s5 + $0x38] sm:$0xff]
      %v615 = vld [vmem:[%s5 + $0x40] sm:$0xff]
      %v616 = vld [vmem:[%s5 + $0x48] sm:$0xff]
      %v617 = vld [vmem:[%s5 + $0x50] sm:$0xff]
      %v618 = vld [vmem:[%s5 + $0x58] sm:$0xff]
      %v619 = vld [vmem:[%s5 + $0x60] sm:$0xff]
      %v620 = vld [vmem:[%s5 + $0x68] sm:$0xff]
      %v621 = vld [vmem:[%s5 + $0x70] sm:$0xff]
      %v622 = vld [vmem:[%s5 + $0x78] sm:$0xff]
      %v623 = vld [vmem:[%s5 + $0x80] sm:$0xff]
      %v624 = vld [vmem:[%s5 + $0x88] sm:$0xff]
      %v625 = vld [vmem:[%s5 + $0x90] sm:$0xff]
      %v626 = vld [vmem:[%s5 + $0x98] sm:$0xff]
      %v627 = vld [vmem:[%s5 + $0xa0] sm:$0xff]
      %v628 = vld [vmem:[%s5 + $0xa8] sm:$0xff]
      %v629 = vld [vmem:[%s5 + $0xb0] sm:$0xff]
      %v630 = vld [vmem:[%s5 + $0xb8] sm:$0xff]
      %v631 = vld [vmem:[%s5 + $0xc0] sm:$0xff]
      %v632 = vld [vmem:[%s5 + $0xc8] sm:$0xff]
      %v633 = vld [vmem:[%s5 + $0xd0] sm:$0xff]
      %v634 = vld [vmem:[%s5 + $0xd8] sm:$0xff]
      %v635 = vld [vmem:[%s5 + $0xe0] sm:$0xff]
      %v636 = vld [vmem:[%s5 + $0xe8] sm:$0xff]
      %v637 = vld [vmem:[%s5 + $0xf0] sm:$0xff]
      %v638 = vld [vmem:[%s5 + $0xf8] sm:$0xff]
      %v639 = vld [vmem:[%s5 + $0x100] sm:$0xff]
      %v640 = vld [vmem:[%s5 + $0x108] sm:$0xff]
      %v641 = vld [vmem:[%s5 + $0x110] sm:$0xff]
      %v642 = vld [vmem:[%s5 + $0x118] sm:$0xff]
      %v643 = vld [vmem:[%s5 + $0x120] sm:$0xff]
      %v644 = vld [vmem:[%s5 + $0x128] sm:$0xff]
      %v645 = vld [vmem:[%s5 + $0x130] sm:$0xff]
      %v646 = vld [vmem:[%s5 + $0x138] sm:$0xff]
      %v647 = vld [vmem:[%s5 + $0x140] sm:$0xff]
      %v648 = vld [vmem:[%s5 + $0x148] sm:$0xff]
      %v649 = vld [vmem:[%s5 + $0x150] sm:$0xff]
      %v650 = vld [vmem:[%s5 + $0x158] sm:$0xff]
      %v651 = vld [vmem:[%s5 + $0x160] sm:$0xff]
      %v652 = vld [vmem:[%s5 + $0x168] sm:$0xff]
      %v653 = vld [vmem:[%s5 + $0x170] sm:$0xff]
      %v654 = vld [vmem:[%s5 + $0x178] sm:$0xff]
      %v655 = vld [vmem:[%s6] sm:$0x7]
      %v656 = vld [vmem:[%s7] sm:$0xff]
      %v657 = vld [vmem:[%s7 + $0x8] sm:$0xff]
      %v658 = vld [vmem:[%s7 + $0x10] sm:$0xff]
      %v659 = vld [vmem:[%s7 + $0x18] sm:$0xff]
      %v660 = vld [vmem:[%s7 + $0x20] sm:$0xff]
      %v661 = vld [vmem:[%s7 + $0x28] sm:$0xff]
      %v662 = vld [vmem:[%s7 + $0x30] sm:$0xff]
      %v663 = vld [vmem:[%s7 + $0x38] sm:$0xff]
      %v664 = vld [vmem:[%s7 + $0x40] sm:$0xff]
      %v665 = vld [vmem:[%s7 + $0x48] sm:$0xff]
      %v666 = vld [vmem:[%s7 + $0x50] sm:$0xff]
      %v667 = vld [vmem:[%s7 + $0x58] sm:$0xff]
      %v668 = vld [vmem:[%s7 + $0x60] sm:$0xff]
      %v669 = vld [vmem:[%s7 + $0x68] sm:$0xff]
      %v670 = vld [vmem:[%s7 + $0x70] sm:$0xff]
      %v671 = vld [vmem:[%s7 + $0x78] sm:$0xff]
      %v672 = vld [vmem:[%s7 + $0x80] sm:$0xff]
      %v673 = vld [vmem:[%s7 + $0x88] sm:$0xff]
      %v674 = vld [vmem:[%s7 + $0x90] sm:$0xff]
      %v675 = vld [vmem:[%s7 + $0x98] sm:$0xff]
      %v676 = vld [vmem:[%s7 + $0xa0] sm:$0xff]
      %v677 = vld [vmem:[%s7 + $0xa8] sm:$0xff]
      %v678 = vld [vmem:[%s7 + $0xb0] sm:$0xff]
      %v679 = vld [vmem:[%s7 + $0xb8] sm:$0xff]
      %v680 = vld [vmem:[%s7 + $0xc0] sm:$0xff]
      %v681 = vld [vmem:[%s7 + $0xc8] sm:$0xff]
      %v682 = vld [vmem:[%s7 + $0xd0] sm:$0xff]
      %v683 = vld [vmem:[%s7 + $0xd8] sm:$0xff]
      %v684 = vld [vmem:[%s7 + $0xe0] sm:$0xff]
      %v685 = vld [vmem:[%s7 + $0xe8] sm:$0xff]
      %v686 = vld [vmem:[%s7 + $0xf0] sm:$0xff]
      %v687 = vld [vmem:[%s7 + $0xf8] sm:$0xff]
      %v688 = vld [vmem:[%s7 + $0x100] sm:$0xff]
      %v689 = vld [vmem:[%s7 + $0x108] sm:$0xff]
      %v690 = vld [vmem:[%s7 + $0x110] sm:$0xff]
      %v691 = vld [vmem:[%s7 + $0x118] sm:$0xff]
      %v692 = vld [vmem:[%s7 + $0x120] sm:$0xff]
      %v693 = vld [vmem:[%s7 + $0x128] sm:$0xff]
      %v694 = vld [vmem:[%s7 + $0x130] sm:$0xff]
      %v695 = vld [vmem:[%s7 + $0x138] sm:$0xff]
      %v696 = vld [vmem:[%s7 + $0x140] sm:$0xff]
      %v697 = vld [vmem:[%s7 + $0x148] sm:$0xff]
      %v698 = vld [vmem:[%s7 + $0x150] sm:$0xff]
      %v699 = vld [vmem:[%s7 + $0x158] sm:$0xff]
      %v700 = vld [vmem:[%s7 + $0x160] sm:$0xff]
      %v701 = vld [vmem:[%s7 + $0x168] sm:$0xff]
      %v702 = vld [vmem:[%s7 + $0x170] sm:$0xff]
      %v703 = vld [vmem:[%s7 + $0x178] sm:$0xff]
      %v704 = vld [vmem:[%s8] sm:$0x7]
      %s705 = smul.u32 %s29, 4
      %v706 = vstv %s705
      %vm707 = vcmp.lt.s32.totalorder %v706, %v606
      %v708 = vld [vmem:[#allocation2] sm:$0xff]
      %v709 = vld [vmem:[%s547] sm:$0xff]
      %v710 = vld [vmem:[%s547 + $0x8] sm:$0xff]
      %v711 = vld [vmem:[%s547 + $0x10] sm:$0xff]
      %v713 = vperm.slane %v655, 0
      %v714 = vperm.slane %v655, 1
      %v715 = vperm.slane %v655, 2
      %719 = vmatpush.msra.mxu0 %v652
      %720 = vmatpush.msra.mxu0 %v649
      %721 = vmatpush.msra.mxu0 %v646
      %722 = vmatpush.msra.mxu0 %v643
      %723 = vmatpush.msra.mxu0 %v640
      %724 = vmatpush.msra.mxu0 %v637
      %725 = vmatpush.msra.mxu0 %v634
      %726 = vmatpush.msra.mxu0 %v631
      %727 = vmatpush.msra.mxu0 %v628
      %728 = vmatpush.msra.mxu0 %v625
      %729 = vmatpush.msra.mxu0 %v622
      %730 = vmatpush.msra.mxu0 %v619
      %731 = vmatpush.msra.mxu0 %v616
      %732 = vmatpush.msra.mxu0 %v613
      %733 = vmatpush.msra.mxu0 %v610
      %734 = vmatpush.msra.mxu0 %v607
      %735 = vmatmul.f32.gmra.mxu0 %v708
      %v736 = vpop.f32.mrf.mxu0
      %v737 = vadd.f32 %v713, %v736
      %738 = vdwg.mxu0
      %739 = vmatpush.msra.mxu0 %v653
      %740 = vmatpush.msra.mxu0 %v650
      %741 = vmatpush.msra.mxu0 %v647
      %742 = vmatpush.msra.mxu0 %v644
      %743 = vmatpush.msra.mxu0 %v641
      %744 = vmatpush.msra.mxu0 %v638
      %745 = vmatpush.msra.mxu0 %v635
      %746 = vmatpush.msra.mxu0 %v632
      %747 = vmatpush.msra.mxu0 %v629
      %748 = vmatpush.msra.mxu0 %v626
      %749 = vmatpush.msra.mxu0 %v623
      %750 = vmatpush.msra.mxu0 %v620
      %751 = vmatpush.msra.mxu0 %v617
      %752 = vmatpush.msra.mxu0 %v614
      %753 = vmatpush.msra.mxu0 %v611
      %754 = vmatpush.msra.mxu0 %v608
      %755 = vmatmul.f32.gmra.mxu0 %v708
      %v756 = vpop.f32.mrf.mxu0
      %v757 = vadd.f32 %v714, %v756
      %758 = vdwg.mxu0
      %759 = vmatpush.msra.mxu0 %v654
      %760 = vmatpush.msra.mxu0 %v651
      %761 = vmatpush.msra.mxu0 %v648
      %762 = vmatpush.msra.mxu0 %v645
      %763 = vmatpush.msra.mxu0 %v642
      %764 = vmatpush.msra.mxu0 %v639
      %765 = vmatpush.msra.mxu0 %v636
      %766 = vmatpush.msra.mxu0 %v633
      %767 = vmatpush.msra.mxu0 %v630
      %768 = vmatpush.msra.mxu0 %v627
      %769 = vmatpush.msra.mxu0 %v624
      %770 = vmatpush.msra.mxu0 %v621
      %771 = vmatpush.msra.mxu0 %v618
      %772 = vmatpush.msra.mxu0 %v615
      %773 = vmatpush.msra.mxu0 %v612
      %774 = vmatpush.msra.mxu0 %v609
      %775 = vmatmul.f32.gmra.mxu0 %v708
      %v776 = vpop.f32.mrf.mxu0
      %v777 = vadd.f32 %v715, %v776
      %778 = vdwg.mxu0
      %v779 = vadd.f32 %v709, %v737
      %v780 = vxor.u32 %v779, 2147483648
      %v781 = vmul.f32 %v780, 1.442695
      %v782 = vpow.pop %v781
      %v783 = vadd.f32 %v782, 1.0
      %v784 = vrcp.pop %v783
      %v785 = vmul.f32 %v783, %v784
      %v786 = vsub.f32 1.0, %v785
      %v787 = vmul.f32 %v784, %v786
      %v788 = vadd.f32 %v784, %v787
      %vm789 = vweird.f32 %v783
      %vm790 = vweird.f32 %v784
      %vm791 = vmor %vm789, %vm790
      %v792 = vsel %vm791, %v784, %v788
      %v793 = vand.u32 2147483647, %v783
      %vm794 = vcmp.eq.f32.partialorder %v793, 8.507059e+37
      %v795 = vand.u32 %v783, 2147483648
      %v796 = vor.u32 1.1754944e-38, %v795
      %v797 = vsel %vm794, %v796, %v792
      %v798 = vmul.f32 1.0, %v797
      %v799 = vadd.f32 %v710, %v757
      %v800 = vxor.u32 %v799, 2147483648
      %v801 = vmul.f32 %v800, 1.442695
      %v802 = vpow.pop %v801
      %v803 = vadd.f32 %v802, 1.0
      %v804 = vrcp.pop %v803
      %v805 = vmul.f32 %v803, %v804
      %v806 = vsub.f32 1.0, %v805
      %v807 = vmul.f32 %v804, %v806
      %v808 = vadd.f32 %v804, %v807
      %vm809 = vweird.f32 %v803
      %vm810 = vweird.f32 %v804
      %vm811 = vmor %vm809, %vm810
      %v812 = vsel %vm811, %v804, %v808
      %v813 = vand.u32 2147483647, %v803
      %vm814 = vcmp.eq.f32.partialorder %v813, 8.507059e+37
      %v815 = vand.u32 %v803, 2147483648
      %v816 = vor.u32 1.1754944e-38, %v815
      %v817 = vsel %vm814, %v816, %v812
      %v818 = vmul.f32 1.0, %v817
      %v819 = vmul.f32 %v798, %v777
      %v820 = vadd.f32 %v711, %v819
      %v821 = vtanh.pop %v820
      %v822 = vsub.f32 1.0, %v818
      %v823 = vmul.f32 %v822, %v821
      %v824 = vmul.f32 %v818, %v708
      %v825 = vadd.f32 %v823, %v824
      %v826 = vsel %vm707, 1, 0
      %827 = vset.pattern.permute.xlu0 0
      %828 = vperm.xlu0 %827, %v826
      %v829 = vpop.permute.xlu0 %828
      %vm830 = vcmp.eq.s32.totalorder %v829, 1
      %v831 = vsel %vm830, %v825, %v708
      %832 = vst [vmem:[#allocation2] sm:$0xff] %v831
      %v833 = vsel %vm830, %v825, 0.0
      %834 = vst [vmem:[%s577] sm:$0xff] %v833
      %s835 = ssub.s32 11, %s705
      %v836 = vstv %s835
      %vm837 = vcmp.lt.s32.totalorder %v836, %v606
      %v838 = vld [vmem:[#allocation3] sm:$0xff]
      %s839 = scalar_lea.vmem %s559, 72
      %v840 = vld [vmem:[%s839] sm:$0xff]
      %v841 = vld [vmem:[%s839 + $0x8] sm:$0xff]
      %v842 = vld [vmem:[%s839 + $0x10] sm:$0xff]
      %v844 = vperm.slane %v704, 0
      %v845 = vperm.slane %v704, 1
      %v846 = vperm.slane %v704, 2
      %850 = vmatpush.msra.mxu0 %v701
      %851 = vmatpush.msra.mxu0 %v698
      %852 = vmatpush.msra.mxu0 %v695
      %853 = vmatpush.msra.mxu0 %v692
      %854 = vmatpush.msra.mxu0 %v689
      %855 = vmatpush.msra.mxu0 %v686
      %856 = vmatpush.msra.mxu0 %v683
      %857 = vmatpush.msra.mxu0 %v680
      %858 = vmatpush.msra.mxu0 %v677
      %859 = vmatpush.msra.mxu0 %v674
      %860 = vmatpush.msra.mxu0 %v671
      %861 = vmatpush.msra.mxu0 %v668
      %862 = vmatpush.msra.mxu0 %v665
      %863 = vmatpush.msra.mxu0 %v662
      %864 = vmatpush.msra.mxu0 %v659
      %865 = vmatpush.msra.mxu0 %v656
      %866 = vmatmul.f32.gmra.mxu0 %v838
      %v867 = vpop.f32.mrf.mxu0
      %v868 = vadd.f32 %v844, %v867
      %869 = vdwg.mxu0
      %870 = vmatpush.msra.mxu0 %v702
      %871 = vmatpush.msra.mxu0 %v699
      %872 = vmatpush.msra.mxu0 %v696
      %873 = vmatpush.msra.mxu0 %v693
      %874 = vmatpush.msra.mxu0 %v690
      %875 = vmatpush.msra.mxu0 %v687
      %876 = vmatpush.msra.mxu0 %v684
      %877 = vmatpush.msra.mxu0 %v681
      %878 = vmatpush.msra.mxu0 %v678
      %879 = vmatpush.msra.mxu0 %v675
      %880 = vmatpush.msra.mxu0 %v672
      %881 = vmatpush.msra.mxu0 %v669
      %882 = vmatpush.msra.mxu0 %v666
      %883 = vmatpush.msra.mxu0 %v663
      %884 = vmatpush.msra.mxu0 %v660
      %885 = vmatpush.msra.mxu0 %v657
      %886 = vmatmul.f32.gmra.mxu0 %v838
      %v887 = vpop.f32.mrf.mxu0
      %v888 = vadd.f32 %v845, %v887
      %889 = vdwg.mxu0
      %890 = vmatpush.msra.mxu0 %v703
      %891 = vmatpush.msra.mxu0 %v700
      %892 = vmatpush.msra.mxu0 %v697
      %893 = vmatpush.msra.mxu0 %v694
      %894 = vmatpush.msra.mxu0 %v691
      %895 = vmatpush.msra.mxu0 %v688
      %896 = vmatpush.msra.mxu0 %v685
      %897 = vmatpush.msra.mxu0 %v682
      %898 = vmatpush.msra.mxu0 %v679
      %899 = vmatpush.msra.mxu0 %v676
      %900 = vmatpush.msra.mxu0 %v673
      %901 = vmatpush.msra.mxu0 %v670
      %902 = vmatpush.msra.mxu0 %v667
      %903 = vmatpush.msra.mxu0 %v664
      %904 = vmatpush.msra.mxu0 %v661
      %905 = vmatpush.msra.mxu0 %v658
      %906 = vmatmul.f32.gmra.mxu0 %v838
      %v907 = vpop.f32.mrf.mxu0
      %v908 = vadd.f32 %v846, %v907
      %909 = vdwg.mxu0
      %v910 = vadd.f32 %v840, %v868
      %v911 = vxor.u32 %v910, 2147483648
      %v912 = vmul.f32 %v911, 1.442695
      %v913 = vpow.pop %v912
      %v914 = vadd.f32 %v913, 1.0
      %v915 = vrcp.pop %v914
      %v916 = vmul.f32 %v914, %v915
      %v917 = vsub.f32 1.0, %v916
      %v918 = vmul.f32 %v915, %v917
      %v919 = vadd.f32 %v915, %v918
      %vm920 = vweird.f32 %v914
      %vm921 = vweird.f32 %v915
      %vm922 = vmor %vm920, %vm921
      %v923 = vsel %vm922, %v915, %v919
      %v924 = vand.u32 2147483647, %v914
      %vm925 = vcmp.eq.f32.partialorder %v924, 8.507059e+37
      %v926 = vand.u32 %v914, 2147483648
      %v927 = vor.u32 1.1754944e-38, %v926
      %v928 = vsel %vm925, %v927, %v923
      %v929 = vmul.f32 1.0, %v928
      %v930 = vadd.f32 %v841, %v888
      %v931 = vxor.u32 %v930, 2147483648
      %v932 = vmul.f32 %v931, 1.442695
      %v933 = vpow.pop %v932
      %v934 = vadd.f32 %v933, 1.0
      %v935 = vrcp.pop %v934
      %v936 = vmul.f32 %v934, %v935
      %v937 = vsub.f32 1.0, %v936
      %v938 = vmul.f32 %v935, %v937
      %v939 = vadd.f32 %v935, %v938
      %vm940 = vweird.f32 %v934
      %vm941 = vweird.f32 %v935
      %vm942 = vmor %vm940, %vm941
      %v943 = vsel %vm942, %v935, %v939
      %v944 = vand.u32 2147483647, %v934
      %vm945 = vcmp.eq.f32.partialorder %v944, 8.507059e+37
      %v946 = vand.u32 %v934, 2147483648
      %v947 = vor.u32 1.1754944e-38, %v946
      %v948 = vsel %vm945, %v947, %v943
      %v949 = vmul.f32 1.0, %v948
      %v950 = vmul.f32 %v929, %v908
      %v951 = vadd.f32 %v842, %v950
      %v952 = vtanh.pop %v951
      %v953 = vsub.f32 1.0, %v949
      %v954 = vmul.f32 %v953, %v952
      %v955 = vmul.f32 %v949, %v838
      %v956 = vadd.f32 %v954, %v955
      %v957 = vsel %vm837, 1, 0
      %958 = vset.pattern.permute.xlu0 0
      %959 = vperm.xlu0 %958, %v957
      %v960 = vpop.permute.xlu0 %959
      %vm961 = vcmp.eq.s32.totalorder %v960, 1
      %v962 = vsel %vm961, %v956, %v838
      %963 = vst [vmem:[#allocation3] sm:$0xff] %v962
      %v964 = vsel %vm961, %v956, 0.0
      %s965 = scalar_lea.vmem %s587, 24
      %966 = vst [vmem:[%s965] sm:$0xff] %v964
      %s967 = sadd.s32 %s705, 1
      %v968 = vstv %s967
      %vm969 = vcmp.lt.s32.totalorder %v968, %v606
      %v970 = vld [vmem:[#allocation2] sm:$0xff]
      %s971 = scalar_lea.vmem %s547, 24
      %v972 = vld [vmem:[%s971] sm:$0xff]
      %v973 = vld [vmem:[%s971 + $0x8] sm:$0xff]
      %v974 = vld [vmem:[%s971 + $0x10] sm:$0xff]
      %975 = vmatpush.msra.mxu0 %v652
      %976 = vmatpush.msra.mxu0 %v649
      %977 = vmatpush.msra.mxu0 %v646
      %978 = vmatpush.msra.mxu0 %v643
      %979 = vmatpush.msra.mxu0 %v640
      %980 = vmatpush.msra.mxu0 %v637
      %981 = vmatpush.msra.mxu0 %v634
      %982 = vmatpush.msra.mxu0 %v631
      %983 = vmatpush.msra.mxu0 %v628
      %984 = vmatpush.msra.mxu0 %v625
      %985 = vmatpush.msra.mxu0 %v622
      %986 = vmatpush.msra.mxu0 %v619
      %987 = vmatpush.msra.mxu0 %v616
      %988 = vmatpush.msra.mxu0 %v613
      %989 = vmatpush.msra.mxu0 %v610
      %990 = vmatpush.msra.mxu0 %v607
      %991 = vmatmul.f32.gmra.mxu0 %v970
      %v992 = vpop.f32.mrf.mxu0
      %v993 = vadd.f32 %v713, %v992
      %994 = vdwg.mxu0
      %995 = vmatpush.msra.mxu0 %v653
      %996 = vmatpush.msra.mxu0 %v650
      %997 = vmatpush.msra.mxu0 %v647
      %998 = vmatpush.msra.mxu0 %v644
      %999 = vmatpush.msra.mxu0 %v641
      %1000 = vmatpush.msra.mxu0 %v638
      %1001 = vmatpush.msra.mxu0 %v635
      %1002 = vmatpush.msra.mxu0 %v632
      %1003 = vmatpush.msra.mxu0 %v629
      %1004 = vmatpush.msra.mxu0 %v626
      %1005 = vmatpush.msra.mxu0 %v623
      %1006 = vmatpush.msra.mxu0 %v620
      %1007 = vmatpush.msra.mxu0 %v617
      %1008 = vmatpush.msra.mxu0 %v614
      %1009 = vmatpush.msra.mxu0 %v611
      %1010 = vmatpush.msra.mxu0 %v608
      %1011 = vmatmul.f32.gmra.mxu0 %v970
      %v1012 = vpop.f32.mrf.mxu0
      %v1013 = vadd.f32 %v714, %v1012
      %1014 = vdwg.mxu0
      %1015 = vmatpush.msra.mxu0 %v654
      %1016 = vmatpush.msra.mxu0 %v651
      %1017 = vmatpush.msra.mxu0 %v648
      %1018 = vmatpush.msra.mxu0 %v645
      %1019 = vmatpush.msra.mxu0 %v642
      %1020 = vmatpush.msra.mxu0 %v639
      %1021 = vmatpush.msra.mxu0 %v636
      %1022 = vmatpush.msra.mxu0 %v633
      %1023 = vmatpush.msra.mxu0 %v630
      %1024 = vmatpush.msra.mxu0 %v627
      %1025 = vmatpush.msra.mxu0 %v624
      %1026 = vmatpush.msra.mxu0 %v621
      %1027 = vmatpush.msra.mxu0 %v618
      %1028 = vmatpush.msra.mxu0 %v615
      %1029 = vmatpush.msra.mxu0 %v612
      %1030 = vmatpush.msra.mxu0 %v609
      %1031 = vmatmul.f32.gmra.mxu0 %v970
      %v1032 = vpop.f32.mrf.mxu0
      %v1033 = vadd.f32 %v715, %v1032
      %1034 = vdwg.mxu0
      %v1035 = vadd.f32 %v972, %v993
      %v1036 = vxor.u32 %v1035, 2147483648
      %v1037 = vmul.f32 %v1036, 1.442695
      %v1038 = vpow.pop %v1037
      %v1039 = vadd.f32 %v1038, 1.0
      %v1040 = vrcp.pop %v1039
      %v1041 = vmul.f32 %v1039, %v1040
      %v1042 = vsub.f32 1.0, %v1041
      %v1043 = vmul.f32 %v1040, %v1042
      %v1044 = vadd.f32 %v1040, %v1043
      %vm1045 = vweird.f32 %v1039
      %vm1046 = vweird.f32 %v1040
      %vm1047 = vmor %vm1045, %vm1046
      %v1048 = vsel %vm1047, %v1040, %v1044
      %v1049 = vand.u32 2147483647, %v1039
      %vm1050 = vcmp.eq.f32.partialorder %v1049, 8.507059e+37
      %v1051 = vand.u32 %v1039, 2147483648
      %v1052 = vor.u32 1.1754944e-38, %v1051
      %v1053 = vsel %vm1050, %v1052, %v1048
      %v1054 = vmul.f32 1.0, %v1053
      %v1055 = vadd.f32 %v973, %v1013
      %v1056 = vxor.u32 %v1055, 2147483648
      %v1057 = vmul.f32 %v1056, 1.442695
      %v1058 = vpow.pop %v1057
      %v1059 = vadd.f32 %v1058, 1.0
      %v1060 = vrcp.pop %v1059
      %v1061 = vmul.f32 %v1059, %v1060
      %v1062 = vsub.f32 1.0, %v1061
      %v1063 = vmul.f32 %v1060, %v1062
      %v1064 = vadd.f32 %v1060, %v1063
      %vm1065 = vweird.f32 %v1059
      %vm1066 = vweird.f32 %v1060
      %vm1067 = vmor %vm1065, %vm1066
      %v1068 = vsel %vm1067, %v1060, %v1064
      %v1069 = vand.u32 2147483647, %v1059
      %vm1070 = vcmp.eq.f32.partialorder %v1069, 8.507059e+37
      %v1071 = vand.u32 %v1059, 2147483648
      %v1072 = vor.u32 1.1754944e-38, %v1071
      %v1073 = vsel %vm1070, %v1072, %v1068
      %v1074 = vmul.f32 1.0, %v1073
      %v1075 = vmul.f32 %v1054, %v1033
      %v1076 = vadd.f32 %v974, %v1075
      %v1077 = vtanh.pop %v1076
      %v1078 = vsub.f32 1.0, %v1074
      %v1079 = vmul.f32 %v1078, %v1077
      %v1080 = vmul.f32 %v1074, %v970
      %v1081 = vadd.f32 %v1079, %v1080
      %v1082 = vsel %vm969, 1, 0
      %1083 = vset.pattern.permute.xlu0 0
      %1084 = vperm.xlu0 %1083, %v1082
      %v1085 = vpop.permute.xlu0 %1084
      %vm1086 = vcmp.eq.s32.totalorder %v1085, 1
      %v1087 = vsel %vm1086, %v1081, %v970
      %1088 = vst [vmem:[#allocation2] sm:$0xff] %v1087
      %v1089 = vsel %vm1086, %v1081, 0.0
      %s1090 = scalar_lea.vmem %s577, 8
      %1091 = vst [vmem:[%s1090] sm:$0xff] %v1089
      %s1092 = ssub.s32 10, %s705
      %v1093 = vstv %s1092
      %vm1094 = vcmp.lt.s32.totalorder %v1093, %v606
      %v1095 = vld [vmem:[#allocation3] sm:$0xff]
      %s1096 = scalar_lea.vmem %s559, 48
      %v1097 = vld [vmem:[%s1096] sm:$0xff]
      %v1098 = vld [vmem:[%s1096 + $0x8] sm:$0xff]
      %v1099 = vld [vmem:[%s1096 + $0x10] sm:$0xff]
      %1100 = vmatpush.msra.mxu0 %v701
      %1101 = vmatpush.msra.mxu0 %v698
      %1102 = vmatpush.msra.mxu0 %v695
      %1103 = vmatpush.msra.mxu0 %v692
      %1104 = vmatpush.msra.mxu0 %v689
      %1105 = vmatpush.msra.mxu0 %v686
      %1106 = vmatpush.msra.mxu0 %v683
      %1107 = vmatpush.msra.mxu0 %v680
      %1108 = vmatpush.msra.mxu0 %v677
      %1109 = vmatpush.msra.mxu0 %v674
      %1110 = vmatpush.msra.mxu0 %v671
      %1111 = vmatpush.msra.mxu0 %v668
      %1112 = vmatpush.msra.mxu0 %v665
      %1113 = vmatpush.msra.mxu0 %v662
      %1114 = vmatpush.msra.mxu0 %v659
      %1115 = vmatpush.msra.mxu0 %v656
      %1116 = vmatmul.f32.gmra.mxu0 %v1095
      %v1117 = vpop.f32.mrf.mxu0
      %v1118 = vadd.f32 %v844, %v1117
      %1119 = vdwg.mxu0
      %1120 = vmatpush.msra.mxu0 %v702
      %1121 = vmatpush.msra.mxu0 %v699
      %1122 = vmatpush.msra.mxu0 %v696
      %1123 = vmatpush.msra.mxu0 %v693
      %1124 = vmatpush.msra.mxu0 %v690
      %1125 = vmatpush.msra.mxu0 %v687
      %1126 = vmatpush.msra.mxu0 %v684
      %1127 = vmatpush.msra.mxu0 %v681
      %1128 = vmatpush.msra.mxu0 %v678
      %1129 = vmatpush.msra.mxu0 %v675
      %1130 = vmatpush.msra.mxu0 %v672
      %1131 = vmatpush.msra.mxu0 %v669
      %1132 = vmatpush.msra.mxu0 %v666
      %1133 = vmatpush.msra.mxu0 %v663
      %1134 = vmatpush.msra.mxu0 %v660
      %1135 = vmatpush.msra.mxu0 %v657
      %1136 = vmatmul.f32.gmra.mxu0 %v1095
      %v1137 = vpop.f32.mrf.mxu0
      %v1138 = vadd.f32 %v845, %v1137
      %1139 = vdwg.mxu0
      %1140 = vmatpush.msra.mxu0 %v703
      %1141 = vmatpush.msra.mxu0 %v700
      %1142 = vmatpush.msra.mxu0 %v697
      %1143 = vmatpush.msra.mxu0 %v694
      %1144 = vmatpush.msra.mxu0 %v691
      %1145 = vmatpush.msra.mxu0 %v688
      %1146 = vmatpush.msra.mxu0 %v685
      %1147 = vmatpush.msra.mxu0 %v682
      %1148 = vmatpush.msra.mxu0 %v679
      %1149 = vmatpush.msra.mxu0 %v676
      %1150 = vmatpush.msra.mxu0 %v673
      %1151 = vmatpush.msra.mxu0 %v670
      %1152 = vmatpush.msra.mxu0 %v667
      %1153 = vmatpush.msra.mxu0 %v664
      %1154 = vmatpush.msra.mxu0 %v661
      %1155 = vmatpush.msra.mxu0 %v658
      %1156 = vmatmul.f32.gmra.mxu0 %v1095
      %v1157 = vpop.f32.mrf.mxu0
      %v1158 = vadd.f32 %v846, %v1157
      %1159 = vdwg.mxu0
      %v1160 = vadd.f32 %v1097, %v1118
      %v1161 = vxor.u32 %v1160, 2147483648
      %v1162 = vmul.f32 %v1161, 1.442695
      %v1163 = vpow.pop %v1162
      %v1164 = vadd.f32 %v1163, 1.0
      %v1165 = vrcp.pop %v1164
      %v1166 = vmul.f32 %v1164, %v1165
      %v1167 = vsub.f32 1.0, %v1166
      %v1168 = vmul.f32 %v1165, %v1167
      %v1169 = vadd.f32 %v1165, %v1168
      %vm1170 = vweird.f32 %v1164
      %vm1171 = vweird.f32 %v1165
      %vm1172 = vmor %vm1170, %vm1171
      %v1173 = vsel %vm1172, %v1165, %v1169
      %v1174 = vand.u32 2147483647, %v1164
      %vm1175 = vcmp.eq.f32.partialorder %v1174, 8.507059e+37
      %v1176 = vand.u32 %v1164, 2147483648
      %v1177 = vor.u32 1.1754944e-38, %v1176
      %v1178 = vsel %vm1175, %v1177, %v1173
      %v1179 = vmul.f32 1.0, %v1178
      %v1180 = vadd.f32 %v1098, %v1138
      %v1181 = vxor.u32 %v1180, 2147483648
      %v1182 = vmul.f32 %v1181, 1.442695
      %v1183 = vpow.pop %v1182
      %v1184 = vadd.f32 %v1183, 1.0
      %v1185 = vrcp.pop %v1184
      %v1186 = vmul.f32 %v1184, %v1185
      %v1187 = vsub.f32 1.0, %v1186
      %v1188 = vmul.f32 %v1185, %v1187
      %v1189 = vadd.f32 %v1185, %v1188
      %vm1190 = vweird.f32 %v1184
      %vm1191 = vweird.f32 %v1185
      %vm1192 = vmor %vm1190, %vm1191
      %v1193 = vsel %vm1192, %v1185, %v1189
      %v1194 = vand.u32 2147483647, %v1184
      %vm1195 = vcmp.eq.f32.partialorder %v1194, 8.507059e+37
      %v1196 = vand.u32 %v1184, 2147483648
      %v1197 = vor.u32 1.1754944e-38, %v1196
      %v1198 = vsel %vm1195, %v1197, %v1193
      %v1199 = vmul.f32 1.0, %v1198
      %v1200 = vmul.f32 %v1179, %v1158
      %v1201 = vadd.f32 %v1099, %v1200
      %v1202 = vtanh.pop %v1201
      %v1203 = vsub.f32 1.0, %v1199
      %v1204 = vmul.f32 %v1203, %v1202
      %v1205 = vmul.f32 %v1199, %v1095
      %v1206 = vadd.f32 %v1204, %v1205
      %v1207 = vsel %vm1094, 1, 0
      %1208 = vset.pattern.permute.xlu0 0
      %1209 = vperm.xlu0 %1208, %v1207
      %v1210 = vpop.permute.xlu0 %1209
      %vm1211 = vcmp.eq.s32.totalorder %v1210, 1
      %v1212 = vsel %vm1211, %v1206, %v1095
      %1213 = vst [vmem:[#allocation3] sm:$0xff] %v1212
      %v1214 = vsel %vm1211, %v1206, 0.0
      %s1215 = scalar_lea.vmem %s587, 16
      %1216 = vst [vmem:[%s1215] sm:$0xff] %v1214
      %s1217 = sadd.s32 %s705, 2
      %v1218 = vstv %s1217
      %vm1219 = vcmp.lt.s32.totalorder %v1218, %v606
      %v1220 = vld [vmem:[#allocation2] sm:$0xff]
      %s1221 = scalar_lea.vmem %s547, 48
      %v1222 = vld [vmem:[%s1221] sm:$0xff]
      %v1223 = vld [vmem:[%s1221 + $0x8] sm:$0xff]
      %v1224 = vld [vmem:[%s1221 + $0x10] sm:$0xff]
      %1225 = vmatpush.msra.mxu0 %v652
      %1226 = vmatpush.msra.mxu0 %v649
      %1227 = vmatpush.msra.mxu0 %v646
      %1228 = vmatpush.msra.mxu0 %v643
      %1229 = vmatpush.msra.mxu0 %v640
      %1230 = vmatpush.msra.mxu0 %v637
      %1231 = vmatpush.msra.mxu0 %v634
      %1232 = vmatpush.msra.mxu0 %v631
      %1233 = vmatpush.msra.mxu0 %v628
      %1234 = vmatpush.msra.mxu0 %v625
      %1235 = vmatpush.msra.mxu0 %v622
      %1236 = vmatpush.msra.mxu0 %v619
      %1237 = vmatpush.msra.mxu0 %v616
      %1238 = vmatpush.msra.mxu0 %v613
      %1239 = vmatpush.msra.mxu0 %v610
      %1240 = vmatpush.msra.mxu0 %v607
      %1241 = vmatmul.f32.gmra.mxu0 %v1220
      %v1242 = vpop.f32.mrf.mxu0
      %v1243 = vadd.f32 %v713, %v1242
      %1244 = vdwg.mxu0
      %1245 = vmatpush.msra.mxu0 %v653
      %1246 = vmatpush.msra.mxu0 %v650
      %1247 = vmatpush.msra.mxu0 %v647
      %1248 = vmatpush.msra.mxu0 %v644
      %1249 = vmatpush.msra.mxu0 %v641
      %1250 = vmatpush.msra.mxu0 %v638
      %1251 = vmatpush.msra.mxu0 %v635
      %1252 = vmatpush.msra.mxu0 %v632
      %1253 = vmatpush.msra.mxu0 %v629
      %1254 = vmatpush.msra.mxu0 %v626
      %1255 = vmatpush.msra.mxu0 %v623
      %1256 = vmatpush.msra.mxu0 %v620
      %1257 = vmatpush.msra.mxu0 %v617
      %1258 = vmatpush.msra.mxu0 %v614
      %1259 = vmatpush.msra.mxu0 %v611
      %1260 = vmatpush.msra.mxu0 %v608
      %1261 = vmatmul.f32.gmra.mxu0 %v1220
      %v1262 = vpop.f32.mrf.mxu0
      %v1263 = vadd.f32 %v714, %v1262
      %1264 = vdwg.mxu0
      %1265 = vmatpush.msra.mxu0 %v654
      %1266 = vmatpush.msra.mxu0 %v651
      %1267 = vmatpush.msra.mxu0 %v648
      %1268 = vmatpush.msra.mxu0 %v645
      %1269 = vmatpush.msra.mxu0 %v642
      %1270 = vmatpush.msra.mxu0 %v639
      %1271 = vmatpush.msra.mxu0 %v636
      %1272 = vmatpush.msra.mxu0 %v633
      %1273 = vmatpush.msra.mxu0 %v630
      %1274 = vmatpush.msra.mxu0 %v627
      %1275 = vmatpush.msra.mxu0 %v624
      %1276 = vmatpush.msra.mxu0 %v621
      %1277 = vmatpush.msra.mxu0 %v618
      %1278 = vmatpush.msra.mxu0 %v615
      %1279 = vmatpush.msra.mxu0 %v612
      %1280 = vmatpush.msra.mxu0 %v609
      %1281 = vmatmul.f32.gmra.mxu0 %v1220
      %v1282 = vpop.f32.mrf.mxu0
      %v1283 = vadd.f32 %v715, %v1282
      %1284 = vdwg.mxu0
      %v1285 = vadd.f32 %v1222, %v1243
      %v1286 = vxor.u32 %v1285, 2147483648
      %v1287 = vmul.f32 %v1286, 1.442695
      %v1288 = vpow.pop %v1287
      %v1289 = vadd.f32 %v1288, 1.0
      %v1290 = vrcp.pop %v1289
      %v1291 = vmul.f32 %v1289, %v1290
      %v1292 = vsub.f32 1.0, %v1291
      %v1293 = vmul.f32 %v1290, %v1292
      %v1294 = vadd.f32 %v1290, %v1293
      %vm1295 = vweird.f32 %v1289
      %vm1296 = vweird.f32 %v1290
      %vm1297 = vmor %vm1295, %vm1296
      %v1298 = vsel %vm1297, %v1290, %v1294
      %v1299 = vand.u32 2147483647, %v1289
      %vm1300 = vcmp.eq.f32.partialorder %v1299, 8.507059e+37
      %v1301 = vand.u32 %v1289, 2147483648
      %v1302 = vor.u32 1.1754944e-38, %v1301
      %v1303 = vsel %vm1300, %v1302, %v1298
      %v1304 = vmul.f32 1.0, %v1303
      %v1305 = vadd.f32 %v1223, %v1263
      %v1306 = vxor.u32 %v1305, 2147483648
      %v1307 = vmul.f32 %v1306, 1.442695
      %v1308 = vpow.pop %v1307
      %v1309 = vadd.f32 %v1308, 1.0
      %v1310 = vrcp.pop %v1309
      %v1311 = vmul.f32 %v1309, %v1310
      %v1312 = vsub.f32 1.0, %v1311
      %v1313 = vmul.f32 %v1310, %v1312
      %v1314 = vadd.f32 %v1310, %v1313
      %vm1315 = vweird.f32 %v1309
      %vm1316 = vweird.f32 %v1310
      %vm1317 = vmor %vm1315, %vm1316
      %v1318 = vsel %vm1317, %v1310, %v1314
      %v1319 = vand.u32 2147483647, %v1309
      %vm1320 = vcmp.eq.f32.partialorder %v1319, 8.507059e+37
      %v1321 = vand.u32 %v1309, 2147483648
      %v1322 = vor.u32 1.1754944e-38, %v1321
      %v1323 = vsel %vm1320, %v1322, %v1318
      %v1324 = vmul.f32 1.0, %v1323
      %v1325 = vmul.f32 %v1304, %v1283
      %v1326 = vadd.f32 %v1224, %v1325
      %v1327 = vtanh.pop %v1326
      %v1328 = vsub.f32 1.0, %v1324
      %v1329 = vmul.f32 %v1328, %v1327
      %v1330 = vmul.f32 %v1324, %v1220
      %v1331 = vadd.f32 %v1329, %v1330
      %v1332 = vsel %vm1219, 1, 0
      %1333 = vset.pattern.permute.xlu0 0
      %1334 = vperm.xlu0 %1333, %v1332
      %v1335 = vpop.permute.xlu0 %1334
      %vm1336 = vcmp.eq.s32.totalorder %v1335, 1
      %v1337 = vsel %vm1336, %v1331, %v1220
      %1338 = vst [vmem:[#allocation2] sm:$0xff] %v1337
      %v1339 = vsel %vm1336, %v1331, 0.0
      %s1340 = scalar_lea.vmem %s577, 16
      %1341 = vst [vmem:[%s1340] sm:$0xff] %v1339
      %s1342 = ssub.s32 9, %s705
      %v1343 = vstv %s1342
      %vm1344 = vcmp.lt.s32.totalorder %v1343, %v606
      %v1345 = vld [vmem:[#allocation3] sm:$0xff]
      %s1346 = scalar_lea.vmem %s559, 24
      %v1347 = vld [vmem:[%s1346] sm:$0xff]
      %v1348 = vld [vmem:[%s1346 + $0x8] sm:$0xff]
      %v1349 = vld [vmem:[%s1346 + $0x10] sm:$0xff]
      %1350 = vmatpush.msra.mxu0 %v701
      %1351 = vmatpush.msra.mxu0 %v698
      %1352 = vmatpush.msra.mxu0 %v695
      %1353 = vmatpush.msra.mxu0 %v692
      %1354 = vmatpush.msra.mxu0 %v689
      %1355 = vmatpush.msra.mxu0 %v686
      %1356 = vmatpush.msra.mxu0 %v683
      %1357 = vmatpush.msra.mxu0 %v680
      %1358 = vmatpush.msra.mxu0 %v677
      %1359 = vmatpush.msra.mxu0 %v674
      %1360 = vmatpush.msra.mxu0 %v671
      %1361 = vmatpush.msra.mxu0 %v668
      %1362 = vmatpush.msra.mxu0 %v665
      %1363 = vmatpush.msra.mxu0 %v662
      %1364 = vmatpush.msra.mxu0 %v659
      %1365 = vmatpush.msra.mxu0 %v656
      %1366 = vmatmul.f32.gmra.mxu0 %v1345
      %v1367 = vpop.f32.mrf.mxu0
      %v1368 = vadd.f32 %v844, %v1367
      %1369 = vdwg.mxu0
      %1370 = vmatpush.msra.mxu0 %v702
      %1371 = vmatpush.msra.mxu0 %v699
      %1372 = vmatpush.msra.mxu0 %v696
      %1373 = vmatpush.msra.mxu0 %v693
      %1374 = vmatpush.msra.mxu0 %v690
      %1375 = vmatpush.msra.mxu0 %v687
      %1376 = vmatpush.msra.mxu0 %v684
      %1377 = vmatpush.msra.mxu0 %v681
      %1378 = vmatpush.msra.mxu0 %v678
      %1379 = vmatpush.msra.mxu0 %v675
      %1380 = vmatpush.msra.mxu0 %v672
      %1381 = vmatpush.msra.mxu0 %v669
      %1382 = vmatpush.msra.mxu0 %v666
      %1383 = vmatpush.msra.mxu0 %v663
      %1384 = vmatpush.msra.mxu0 %v660
      %1385 = vmatpush.msra.mxu0 %v657
      %1386 = vmatmul.f32.gmra.mxu0 %v1345
      %v1387 = vpop.f32.mrf.mxu0
      %v1388 = vadd.f32 %v845, %v1387
      %1389 = vdwg.mxu0
      %1390 = vmatpush.msra.mxu0 %v703
      %1391 = vmatpush.msra.mxu0 %v700
      %1392 = vmatpush.msra.mxu0 %v697
      %1393 = vmatpush.msra.mxu0 %v694
      %1394 = vmatpush.msra.mxu0 %v691
      %1395 = vmatpush.msra.mxu0 %v688
      %1396 = vmatpush.msra.mxu0 %v685
      %1397 = vmatpush.msra.mxu0 %v682
      %1398 = vmatpush.msra.mxu0 %v679
      %1399 = vmatpush.msra.mxu0 %v676
      %1400 = vmatpush.msra.mxu0 %v673
      %1401 = vmatpush.msra.mxu0 %v670
      %1402 = vmatpush.msra.mxu0 %v667
      %1403 = vmatpush.msra.mxu0 %v664
      %1404 = vmatpush.msra.mxu0 %v661
      %1405 = vmatpush.msra.mxu0 %v658
      %1406 = vmatmul.f32.gmra.mxu0 %v1345
      %v1407 = vpop.f32.mrf.mxu0
      %v1408 = vadd.f32 %v846, %v1407
      %1409 = vdwg.mxu0
      %v1410 = vadd.f32 %v1347, %v1368
      %v1411 = vxor.u32 %v1410, 2147483648
      %v1412 = vmul.f32 %v1411, 1.442695
      %v1413 = vpow.pop %v1412
      %v1414 = vadd.f32 %v1413, 1.0
      %v1415 = vrcp.pop %v1414
      %v1416 = vmul.f32 %v1414, %v1415
      %v1417 = vsub.f32 1.0, %v1416
      %v1418 = vmul.f32 %v1415, %v1417
      %v1419 = vadd.f32 %v1415, %v1418
      %vm1420 = vweird.f32 %v1414
      %vm1421 = vweird.f32 %v1415
      %vm1422 = vmor %vm1420, %vm1421
      %v1423 = vsel %vm1422, %v1415, %v1419
      %v1424 = vand.u32 2147483647, %v1414
      %vm1425 = vcmp.eq.f32.partialorder %v1424, 8.507059e+37
      %v1426 = vand.u32 %v1414, 2147483648
      %v1427 = vor.u32 1.1754944e-38, %v1426
      %v1428 = vsel %vm1425, %v1427, %v1423
      %v1429 = vmul.f32 1.0, %v1428
      %v1430 = vadd.f32 %v1348, %v1388
      %v1431 = vxor.u32 %v1430, 2147483648
      %v1432 = vmul.f32 %v1431, 1.442695
      %v1433 = vpow.pop %v1432
      %v1434 = vadd.f32 %v1433, 1.0
      %v1435 = vrcp.pop %v1434
      %v1436 = vmul.f32 %v1434, %v1435
      %v1437 = vsub.f32 1.0, %v1436
      %v1438 = vmul.f32 %v1435, %v1437
      %v1439 = vadd.f32 %v1435, %v1438
      %vm1440 = vweird.f32 %v1434
      %vm1441 = vweird.f32 %v1435
      %vm1442 = vmor %vm1440, %vm1441
      %v1443 = vsel %vm1442, %v1435, %v1439
      %v1444 = vand.u32 2147483647, %v1434
      %vm1445 = vcmp.eq.f32.partialorder %v1444, 8.507059e+37
      %v1446 = vand.u32 %v1434, 2147483648
      %v1447 = vor.u32 1.1754944e-38, %v1446
      %v1448 = vsel %vm1445, %v1447, %v1443
      %v1449 = vmul.f32 1.0, %v1448
      %v1450 = vmul.f32 %v1429, %v1408
      %v1451 = vadd.f32 %v1349, %v1450
      %v1452 = vtanh.pop %v1451
      %v1453 = vsub.f32 1.0, %v1449
      %v1454 = vmul.f32 %v1453, %v1452
      %v1455 = vmul.f32 %v1449, %v1345
      %v1456 = vadd.f32 %v1454, %v1455
      %v1457 = vsel %vm1344, 1, 0
      %1458 = vset.pattern.permute.xlu0 0
      %1459 = vperm.xlu0 %1458, %v1457
      %v1460 = vpop.permute.xlu0 %1459
      %vm1461 = vcmp.eq.s32.totalorder %v1460, 1
      %v1462 = vsel %vm1461, %v1456, %v1345
      %1463 = vst [vmem:[#allocation3] sm:$0xff] %v1462
      %v1464 = vsel %vm1461, %v1456, 0.0
      %s1465 = scalar_lea.vmem %s587, 8
      %1466 = vst [vmem:[%s1465] sm:$0xff] %v1464
      %s1467 = sadd.s32 %s705, 3
      %v1468 = vstv %s1467
      %vm1469 = vcmp.lt.s32.totalorder %v1468, %v606
      %v1470 = vld [vmem:[#allocation2] sm:$0xff]
      %s1471 = scalar_lea.vmem %s547, 72
      %v1472 = vld [vmem:[%s1471] sm:$0xff]
      %v1473 = vld [vmem:[%s1471 + $0x8] sm:$0xff]
      %v1474 = vld [vmem:[%s1471 + $0x10] sm:$0xff]
      %1475 = vmatpush.msra.mxu0 %v652
      %1476 = vmatpush.msra.mxu0 %v649
      %1477 = vmatpush.msra.mxu0 %v646
      %1478 = vmatpush.msra.mxu0 %v643
      %1479 = vmatpush.msra.mxu0 %v640
      %1480 = vmatpush.msra.mxu0 %v637
      %1481 = vmatpush.msra.mxu0 %v634
      %1482 = vmatpush.msra.mxu0 %v631
      %1483 = vmatpush.msra.mxu0 %v628
      %1484 = vmatpush.msra.mxu0 %v625
      %1485 = vmatpush.msra.mxu0 %v622
      %1486 = vmatpush.msra.mxu0 %v619
      %1487 = vmatpush.msra.mxu0 %v616
      %1488 = vmatpush.msra.mxu0 %v613
      %1489 = vmatpush.msra.mxu0 %v610
      %1490 = vmatpush.msra.mxu0 %v607
      %1491 = vmatmul.f32.gmra.mxu0 %v1470
      %v1492 = vpop.f32.mrf.mxu0
      %v1493 = vadd.f32 %v713, %v1492
      %1494 = vdwg.mxu0
      %1495 = vmatpush.msra.mxu0 %v653
      %1496 = vmatpush.msra.mxu0 %v650
      %1497 = vmatpush.msra.mxu0 %v647
      %1498 = vmatpush.msra.mxu0 %v644
      %1499 = vmatpush.msra.mxu0 %v641
      %1500 = vmatpush.msra.mxu0 %v638
      %1501 = vmatpush.msra.mxu0 %v635
      %1502 = vmatpush.msra.mxu0 %v632
      %1503 = vmatpush.msra.mxu0 %v629
      %1504 = vmatpush.msra.mxu0 %v626
      %1505 = vmatpush.msra.mxu0 %v623
      %1506 = vmatpush.msra.mxu0 %v620
      %1507 = vmatpush.msra.mxu0 %v617
      %1508 = vmatpush.msra.mxu0 %v614
      %1509 = vmatpush.msra.mxu0 %v611
      %1510 = vmatpush.msra.mxu0 %v608
      %1511 = vmatmul.f32.gmra.mxu0 %v1470
      %v1512 = vpop.f32.mrf.mxu0
      %v1513 = vadd.f32 %v714, %v1512
      %1514 = vdwg.mxu0
      %1515 = vmatpush.msra.mxu0 %v654
      %1516 = vmatpush.msra.mxu0 %v651
      %1517 = vmatpush.msra.mxu0 %v648
      %1518 = vmatpush.msra.mxu0 %v645
      %1519 = vmatpush.msra.mxu0 %v642
      %1520 = vmatpush.msra.mxu0 %v639
      %1521 = vmatpush.msra.mxu0 %v636
      %1522 = vmatpush.msra.mxu0 %v633
      %1523 = vmatpush.msra.mxu0 %v630
      %1524 = vmatpush.msra.mxu0 %v627
      %1525 = vmatpush.msra.mxu0 %v624
      %1526 = vmatpush.msra.mxu0 %v621
      %1527 = vmatpush.msra.mxu0 %v618
      %1528 = vmatpush.msra.mxu0 %v615
      %1529 = vmatpush.msra.mxu0 %v612
      %1530 = vmatpush.msra.mxu0 %v609
      %1531 = vmatmul.f32.gmra.mxu0 %v1470
      %v1532 = vpop.f32.mrf.mxu0
      %v1533 = vadd.f32 %v715, %v1532
      %1534 = vdwg.mxu0
      %v1535 = vadd.f32 %v1472, %v1493
      %v1536 = vxor.u32 %v1535, 2147483648
      %v1537 = vmul.f32 %v1536, 1.442695
      %v1538 = vpow.pop %v1537
      %v1539 = vadd.f32 %v1538, 1.0
      %v1540 = vrcp.pop %v1539
      %v1541 = vmul.f32 %v1539, %v1540
      %v1542 = vsub.f32 1.0, %v1541
      %v1543 = vmul.f32 %v1540, %v1542
      %v1544 = vadd.f32 %v1540, %v1543
      %vm1545 = vweird.f32 %v1539
      %vm1546 = vweird.f32 %v1540
      %vm1547 = vmor %vm1545, %vm1546
      %v1548 = vsel %vm1547, %v1540, %v1544
      %v1549 = vand.u32 2147483647, %v1539
      %vm1550 = vcmp.eq.f32.partialorder %v1549, 8.507059e+37
      %v1551 = vand.u32 %v1539, 2147483648
      %v1552 = vor.u32 1.1754944e-38, %v1551
      %v1553 = vsel %vm1550, %v1552, %v1548
      %v1554 = vmul.f32 1.0, %v1553
      %v1555 = vadd.f32 %v1473, %v1513
      %v1556 = vxor.u32 %v1555, 2147483648
      %v1557 = vmul.f32 %v1556, 1.442695
      %v1558 = vpow.pop %v1557
      %v1559 = vadd.f32 %v1558, 1.0
      %v1560 = vrcp.pop %v1559
      %v1561 = vmul.f32 %v1559, %v1560
      %v1562 = vsub.f32 1.0, %v1561
      %v1563 = vmul.f32 %v1560, %v1562
      %v1564 = vadd.f32 %v1560, %v1563
      %vm1565 = vweird.f32 %v1559
      %vm1566 = vweird.f32 %v1560
      %vm1567 = vmor %vm1565, %vm1566
      %v1568 = vsel %vm1567, %v1560, %v1564
      %v1569 = vand.u32 2147483647, %v1559
      %vm1570 = vcmp.eq.f32.partialorder %v1569, 8.507059e+37
      %v1571 = vand.u32 %v1559, 2147483648
      %v1572 = vor.u32 1.1754944e-38, %v1571
      %v1573 = vsel %vm1570, %v1572, %v1568
      %v1574 = vmul.f32 1.0, %v1573
      %v1575 = vmul.f32 %v1554, %v1533
      %v1576 = vadd.f32 %v1474, %v1575
      %v1577 = vtanh.pop %v1576
      %v1578 = vsub.f32 1.0, %v1574
      %v1579 = vmul.f32 %v1578, %v1577
      %v1580 = vmul.f32 %v1574, %v1470
      %v1581 = vadd.f32 %v1579, %v1580
      %v1582 = vsel %vm1469, 1, 0
      %1583 = vset.pattern.permute.xlu0 0
      %1584 = vperm.xlu0 %1583, %v1582
      %v1585 = vpop.permute.xlu0 %1584
      %vm1586 = vcmp.eq.s32.totalorder %v1585, 1
      %v1587 = vsel %vm1586, %v1581, %v1470
      %1588 = vst [vmem:[#allocation2] sm:$0xff] %v1587
      %v1589 = vsel %vm1586, %v1581, 0.0
      %s1590 = scalar_lea.vmem %s577, 24
      %1591 = vst [vmem:[%s1590] sm:$0xff] %v1589
      %s1592 = ssub.s32 8, %s705
      %v1593 = vstv %s1592
      %vm1594 = vcmp.lt.s32.totalorder %v1593, %v606
      %v1595 = vld [vmem:[#allocation3] sm:$0xff]
      %v1596 = vld [vmem:[%s559] sm:$0xff]
      %v1597 = vld [vmem:[%s559 + $0x8] sm:$0xff]
      %v1598 = vld [vmem:[%s559 + $0x10] sm:$0xff]
      %1599 = vmatpush.msra.mxu0 %v701
      %1600 = vmatpush.msra.mxu0 %v698
      %1601 = vmatpush.msra.mxu0 %v695
      %1602 = vmatpush.msra.mxu0 %v692
      %1603 = vmatpush.msra.mxu0 %v689
      %1604 = vmatpush.msra.mxu0 %v686
      %1605 = vmatpush.msra.mxu0 %v683
      %1606 = vmatpush.msra.mxu0 %v680
      %1607 = vmatpush.msra.mxu0 %v677
      %1608 = vmatpush.msra.mxu0 %v674
      %1609 = vmatpush.msra.mxu0 %v671
      %1610 = vmatpush.msra.mxu0 %v668
      %1611 = vmatpush.msra.mxu0 %v665
      %1612 = vmatpush.msra.mxu0 %v662
      %1613 = vmatpush.msra.mxu0 %v659
      %1614 = vmatpush.msra.mxu0 %v656
      %1615 = vmatmul.f32.gmra.mxu0 %v1595
      %v1616 = vpop.f32.mrf.mxu0
      %v1617 = vadd.f32 %v844, %v1616
      %1618 = vdwg.mxu0
      %1619 = vmatpush.msra.mxu0 %v702
      %1620 = vmatpush.msra.mxu0 %v699
      %1621 = vmatpush.msra.mxu0 %v696
      %1622 = vmatpush.msra.mxu0 %v693
      %1623 = vmatpush.msra.mxu0 %v690
      %1624 = vmatpush.msra.mxu0 %v687
      %1625 = vmatpush.msra.mxu0 %v684
      %1626 = vmatpush.msra.mxu0 %v681
      %1627 = vmatpush.msra.mxu0 %v678
      %1628 = vmatpush.msra.mxu0 %v675
      %1629 = vmatpush.msra.mxu0 %v672
      %1630 = vmatpush.msra.mxu0 %v669
      %1631 = vmatpush.msra.mxu0 %v666
      %1632 = vmatpush.msra.mxu0 %v663
      %1633 = vmatpush.msra.mxu0 %v660
      %1634 = vmatpush.msra.mxu0 %v657
      %1635 = vmatmul.f32.gmra.mxu0 %v1595
      %v1636 = vpop.f32.mrf.mxu0
      %v1637 = vadd.f32 %v845, %v1636
      %1638 = vdwg.mxu0
      %1639 = vmatpush.msra.mxu0 %v703
      %1640 = vmatpush.msra.mxu0 %v700
      %1641 = vmatpush.msra.mxu0 %v697
      %1642 = vmatpush.msra.mxu0 %v694
      %1643 = vmatpush.msra.mxu0 %v691
      %1644 = vmatpush.msra.mxu0 %v688
      %1645 = vmatpush.msra.mxu0 %v685
      %1646 = vmatpush.msra.mxu0 %v682
      %1647 = vmatpush.msra.mxu0 %v679
      %1648 = vmatpush.msra.mxu0 %v676
      %1649 = vmatpush.msra.mxu0 %v673
      %1650 = vmatpush.msra.mxu0 %v670
      %1651 = vmatpush.msra.mxu0 %v667
      %1652 = vmatpush.msra.mxu0 %v664
      %1653 = vmatpush.msra.mxu0 %v661
      %1654 = vmatpush.msra.mxu0 %v658
      %1655 = vmatmul.f32.gmra.mxu0 %v1595
      %v1656 = vpop.f32.mrf.mxu0
      %v1657 = vadd.f32 %v846, %v1656
      %1658 = vdwg.mxu0
      %v1659 = vadd.f32 %v1596, %v1617
      %v1660 = vxor.u32 %v1659, 2147483648
      %v1661 = vmul.f32 %v1660, 1.442695
      %v1662 = vpow.pop %v1661
      %v1663 = vadd.f32 %v1662, 1.0
      %v1664 = vrcp.pop %v1663
      %v1665 = vmul.f32 %v1663, %v1664
      %v1666 = vsub.f32 1.0, %v1665
      %v1667 = vmul.f32 %v1664, %v1666
      %v1668 = vadd.f32 %v1664, %v1667
      %vm1669 = vweird.f32 %v1663
      %vm1670 = vweird.f32 %v1664
      %vm1671 = vmor %vm1669, %vm1670
      %v1672 = vsel %vm1671, %v1664, %v1668
      %v1673 = vand.u32 2147483647, %v1663
      %vm1674 = vcmp.eq.f32.partialorder %v1673, 8.507059e+37
      %v1675 = vand.u32 %v1663, 2147483648
      %v1676 = vor.u32 1.1754944e-38, %v1675
      %v1677 = vsel %vm1674, %v1676, %v1672
      %v1678 = vmul.f32 1.0, %v1677
      %v1679 = vadd.f32 %v1597, %v1637
      %v1680 = vxor.u32 %v1679, 2147483648
      %v1681 = vmul.f32 %v1680, 1.442695
      %v1682 = vpow.pop %v1681
      %v1683 = vadd.f32 %v1682, 1.0
      %v1684 = vrcp.pop %v1683
      %v1685 = vmul.f32 %v1683, %v1684
      %v1686 = vsub.f32 1.0, %v1685
      %v1687 = vmul.f32 %v1684, %v1686
      %v1688 = vadd.f32 %v1684, %v1687
      %vm1689 = vweird.f32 %v1683
      %vm1690 = vweird.f32 %v1684
      %vm1691 = vmor %vm1689, %vm1690
      %v1692 = vsel %vm1691, %v1684, %v1688
      %v1693 = vand.u32 2147483647, %v1683
      %vm1694 = vcmp.eq.f32.partialorder %v1693, 8.507059e+37
      %v1695 = vand.u32 %v1683, 2147483648
      %v1696 = vor.u32 1.1754944e-38, %v1695
      %v1697 = vsel %vm1694, %v1696, %v1692
      %v1698 = vmul.f32 1.0, %v1697
      %v1699 = vmul.f32 %v1678, %v1657
      %v1700 = vadd.f32 %v1598, %v1699
      %v1701 = vtanh.pop %v1700
      %v1702 = vsub.f32 1.0, %v1698
      %v1703 = vmul.f32 %v1702, %v1701
      %v1704 = vmul.f32 %v1698, %v1595
      %v1705 = vadd.f32 %v1703, %v1704
      %v1706 = vsel %vm1594, 1, 0
      %1707 = vset.pattern.permute.xlu0 0
      %1708 = vperm.xlu0 %1707, %v1706
      %v1709 = vpop.permute.xlu0 %1708
      %vm1710 = vcmp.eq.s32.totalorder %v1709, 1
      %v1711 = vsel %vm1710, %v1705, %v1595
      %1712 = vst [vmem:[#allocation3] sm:$0xff] %v1711
      %v1713 = vsel %vm1710, %v1705, 0.0
      %1714 = vst [vmem:[%s587] sm:$0xff] %v1713
      %p1715 = scmp.eq.s32.totalorder %s29, 2
      // Predicated region
      $region61: #{encoder_rnn_forward.1} parent=55 // pred_check
        %p1716 = pneg %p1715
      $region62: #{encoder_rnn_forward.1} parent=55 // pred_check_branch
        %1718 = sbr.rel (%p1716) target = $region64
      $region63: #{encoder_rnn_forward.1} parent=55 // pred_region
        %v1719 = vld [vmem:[#allocation2] sm:$0xff]
        %1720 = vst [vmem:[%s593] sm:$0xff] %v1719
        %v1721 = vld [vmem:[#allocation3] sm:$0xff]
        %1722 = vst [vmem:[%s597] sm:$0xff] %v1721
      $region64: #{encoder_rnn_forward.1} parent=55 // pred_fallthru
        _
      %s1723 = smul.u32 4, %s29
      %p1724 = scmp.lt.s32.totalorder %s1723, 11
      %s1725 = scalar_select %p1724, %s1723, 11
      %p1726 = scmp.lt.s32.totalorder %s28, 0
      %s1727 = scalar_select %p1726, %s28, 0
      %s1728 = sadd.s32 %s1727, %s1725
      %s1729 = smul.addr %s1728, 8
      %s1730 = scalar_lea.vmem %s9, %s1729
      %s1731 = ssub.s32 2, %s29
      %s1732 = smul.u32 4, %s1731
      %p1733 = scmp.lt.s32.totalorder %s1732, 11
      %s1734 = scalar_select %p1733, %s1732, 11
      %p1735 = scmp.lt.s32.totalorder %s28, 0
      %s1736 = scalar_select %p1735, %s28, 0
      %s1737 = sadd.s32 %s1736, %s1734
      %s1738 = smul.addr %s1737, 8
      %s1739 = scalar_lea.vmem %s10, %s1738
      %p1740 = scmp.lt.s32.totalorder %s28, 0
      %s1741 = scalar_select %p1740, %s28, 0
      %s1742 = smul.addr %s1741, 8
      %s1743 = scalar_lea.vmem %s11, %s1742
      %p1744 = scmp.lt.s32.totalorder %s28, 0
      %s1745 = scalar_select %p1744, %s28, 0
      %s1746 = smul.addr %s1745, 8
      %s1747 = scalar_lea.vmem %s12, %s1746
      // Predicated region
      $region65: #{encoder_rnn_forward.1} parent=55 // pred_check
        %p1748 = pneg %p276
      $region66: #{encoder_rnn_forward.1} parent=55 // pred_check_branch
        %1750 = sbr.rel (%p1748) target = $region68
      $region67: #{encoder_rnn_forward.1} parent=55 // pred_region
        %s1751 = smul.u32 4, %s29
      $region68: #{encoder_rnn_forward.1} parent=55 // pred_fallthru
        _
      // Predicated region
      $region69: #{encoder_rnn_forward.1} parent=55 // pred_check
        %p1752 = pneg %p306
      $region70: #{encoder_rnn_forward.1} parent=55 // pred_check_branch
        %1754 = sbr.rel (%p1752) target = $region72
      $region71: #{encoder_rnn_forward.1} parent=55 // pred_region
        %s1755 = ssub.s32 2, %s29
        %s1756 = smul.u32 4, %s1755
      $region72: #{encoder_rnn_forward.1} parent=55 // pred_fallthru
        _
      // Predicated region
      $region73: #{encoder_rnn_forward.1} parent=55 // pred_check
        %p1757 = pneg %p332
      $region74: #{encoder_rnn_forward.1} parent=55 // pred_check_branch
        %1759 = sbr.rel (%p1757) target = $region76
      $region75: #{encoder_rnn_forward.1} parent=55 // pred_region
        _
      $region76: #{encoder_rnn_forward.1} parent=55 // pred_fallthru
        _
      // Predicated region
      $region77: #{encoder_rnn_forward.1} parent=55 // pred_check
        %p1760 = pneg %p358
      $region78: #{encoder_rnn_forward.1} parent=55 // pred_check_branch
        %1762 = sbr.rel (%p1760) target = $region80
      $region79: #{encoder_rnn_forward.1} parent=55 // pred_region
        _
      $region80: #{encoder_rnn_forward.1} parent=55 // pred_fallthru
        _
      // Predicated region
      $region81: #{encoder_rnn_forward.1} parent=55 // pred_check
        %p1763 = pneg %p332
      $region82: #{encoder_rnn_forward.1} parent=55 // pred_check_branch
        %1765 = sbr.rel (%p1763) target = $region84
      $region83: #{encoder_rnn_forward.1} parent=55 // pred_region
        %p1766 = scmp.lt.s32.totalorder %s28, 0
        %s1767 = scalar_select %p1766, %s28, 0
        %s1768 = smul.addr %s1767, 8
        %s1769 = scalar_lea.vmem %s11, %s1768
      $region84: #{encoder_rnn_forward.1} parent=55 // pred_fallthru
        _
      // Predicated region
      $region85: #{encoder_rnn_forward.1} parent=55 // pred_check
        %p1770 = pneg %p358
      $region86: #{encoder_rnn_forward.1} parent=55 // pred_check_branch
        %1772 = sbr.rel (%p1770) target = $region88
      $region87: #{encoder_rnn_forward.1} parent=55 // pred_region
        %p1773 = scmp.lt.s32.totalorder %s28, 0
        %s1774 = scalar_select %p1773, %s28, 0
        %s1775 = smul.addr %s1774, 8
        %s1776 = scalar_lea.vmem %s12, %s1775
      $region88: #{encoder_rnn_forward.1} parent=55 // pred_fallthru
        _
    $region56: #{encoder_rnn_forward.1} parent=5 // pred_fallthru
      _
    %p1777 = scmp.le.s32.totalorder 2, %s19
    // Predicated region
    $region89: #{encoder_rnn_forward.1} parent=5 // pred_check
      %p1778 = pneg %p1777
    $region90: #{encoder_rnn_forward.1} parent=5 // pred_check_branch
      %1780 = sbr.rel (%p1778) target = $region92
    $region91: #{encoder_rnn_forward.1} parent=5 // pred_region
      %s1781 = ssub.s32 %s19, 2
      // Predicated region
      $region93: #{encoder_rnn_forward.1} parent=91 // pred_check
        %p1782 = pneg %p282
      $region94: #{encoder_rnn_forward.1} parent=91 // pred_check_branch
        %1784 = sbr.rel (%p1782) target = $region96
      $region95: #{encoder_rnn_forward.1} parent=91 // pred_region
        %s1785 = smul.u32 4, %s31
        %p1786 = scmp.lt.s32.totalorder %s1785, 11
        %s1787 = scalar_select %p1786, %s1785, 11
        %p1788 = scmp.lt.s32.totalorder %s30, 0
        %s1789 = scalar_select %p1788, %s30, 0
        %s1790 = sadd.s32 %s1789, %s1787
        %s1791 = smul.addr %s1790, 8
        %s1792 = scalar_lea.vmem %s9, %s1791
      $region96: #{encoder_rnn_forward.1} parent=91 // pred_fallthru
        _
      // Predicated region
      $region97: #{encoder_rnn_forward.1} parent=91 // pred_check
        %p1793 = pneg %p312
      $region98: #{encoder_rnn_forward.1} parent=91 // pred_check_branch
        %1795 = sbr.rel (%p1793) target = $region100
      $region99: #{encoder_rnn_forward.1} parent=91 // pred_region
        %s1796 = ssub.s32 2, %s31
        %s1797 = smul.u32 4, %s1796
        %p1798 = scmp.lt.s32.totalorder %s1797, 11
        %s1799 = scalar_select %p1798, %s1797, 11
        %p1800 = scmp.lt.s32.totalorder %s30, 0
        %s1801 = scalar_select %p1800, %s30, 0
        %s1802 = sadd.s32 %s1801, %s1799
        %s1803 = smul.addr %s1802, 8
        %s1804 = scalar_lea.vmem %s10, %s1803
      $region100: #{encoder_rnn_forward.1} parent=91 // pred_fallthru
        _
    $region92: #{encoder_rnn_forward.1} parent=5 // pred_fallthru
      _
  $region6: #{encoder_rnn_forward.1} parent=0 // loop_footer
    %s23 = sadd.s32 1, %s19
  $region7: #{encoder_rnn_forward.1} parent=0 // loop_footer_branch
    %18 = sbr.rel target = $region3
  $region8: #{encoder_rnn_forward.1} parent=0 // loop_exit
    _

</llo_original>
